<compile_context>
chip_gen: v7x
topology: tpu7x:2x2x1
jax: 0.10.0
libtpu: 0.0.40
codegen_flags: <defaults>
</compile_context>

<pallas_src>
import functools

import jax
import jax.numpy as jnp
from jax.experimental import pallas as pl
from jax.experimental.pallas import tpu as pltpu

LN_EPS = 1e-5  # PyTorch nn.LayerNorm default


def _round_up(n, m):
    return ((n + m - 1) // m) * m


# --------------------------------------------------------------------------- kernels
def _qkv_proj_kernel(kx_ref, vx_ref, qx_ref,
                     wk_ref, bk_ref, wv_ref, bv_ref, wq_ref, bq_ref,
                     ko_ref, vo_ref, qo_ref):
    """Fused Q/K/V projections: bf16 inputs, f32 accumulation, bf16 outputs."""
    def proj(x_ref, w_ref, b_ref):
        y = jnp.dot(x_ref[...], w_ref[...], preferred_element_type=jnp.float32)
        return (y + b_ref[...]).astype(jnp.bfloat16)

    ko_ref[...] = proj(kx_ref, wk_ref, bk_ref)
    vo_ref[...] = proj(vx_ref, wv_ref, bv_ref)
    qo_ref[...] = proj(qx_ref, wq_ref, bq_ref)


def _attention_kernel(q_ref, k_ref, v_ref, ctx_ref, attn_ref, *, scale):
    """Scaled dot-product attention for a block of heads. Softmax kept in f32."""
    q = q_ref[...]                                            # (hb, S, d) bf16
    k = k_ref[...]
    v = v_ref[...]

    s = jnp.einsum("bqd,bkd->bqk", q, k,
                   preferred_element_type=jnp.float32) * scale
    s = s - jnp.max(s, axis=-1, keepdims=True)
    p = jnp.exp(s)
    attn = p / jnp.sum(p, axis=-1, keepdims=True)             # f32 probabilities
    attn_ref[...] = attn

    ctx = jnp.einsum("bqk,bkd->bqd", attn.astype(v.dtype), v,
                     preferred_element_type=jnp.float32)
    ctx_ref[...] = ctx.astype(ctx_ref.dtype)


def _final_kernel(ctx_ref, res_ref, wo_ref, bo_ref, g_ref, beta_ref, o_ref):
    """linear_final (bf16 matmul, f32 accum) + residual + LayerNorm (f32)."""
    y = jnp.dot(ctx_ref[...], wo_ref[...], preferred_element_type=jnp.float32)
    z = res_ref[...] + (y + bo_ref[...])                      # residual stays f32
    mean = jnp.mean(z, axis=-1, keepdims=True)
    cen = z - mean
    var = jnp.mean(cen * cen, axis=-1, keepdims=True)
    # fold gamma into the rsqrt factor (one (tm, D) multiply instead of two)
    o_ref[...] = (cen * (g_ref[...] * jax.lax.rsqrt(var + LN_EPS))
                  + beta_ref[...]).astype(o_ref.dtype)


# --------------------------------------------------------------------------- wrapper
@functools.partial(jax.jit, static_argnames=("num_heads", "row_tile", "head_tile"))
def multi_head_attention(key_x, value_x, query_x,
                         wk, bk, wv, bv, wq, bq, wo, bo, gamma, beta,
                         *, num_heads, row_tile=256, head_tile=4):
    """Weights are the matmul-oriented (in, out) matrices, i.e. nn.Linear.weight.T."""
    B, S, D = query_x.shape
    H = num_heads
    d = D // H
    R = B * S
    scale = float((d // H) ** (-0.5))          # replicate the PyTorch scale expression

    bf = jnp.bfloat16
    f32 = jnp.float32

    # ---------------- stage 1: fused Q/K/V projections over row tiles ----------------
    tm = min(row_tile, _round_up(R, 8))
    R_pad = _round_up(R, tm)

    def pad_rows(a2d):
        return jnp.pad(a2d, ((0, R_pad - R), (0, 0)))

    kx = pad_rows(key_x.reshape(R, D)).astype(bf)
    vx = pad_rows(value_x.reshape(R, D)).astype(bf)
    qx = pad_rows(query_x.reshape(R, D)).astype(bf)

    wk_b, wv_b, wq_b, wo_b = (w.astype(bf) for w in (wk, wv, wq, wo))
    bk_r = bk.reshape(1, D).astype(f32)
    bv_r = bv.reshape(1, D).astype(f32)
    bq_r = bq.reshape(1, D).astype(f32)
    bo_r = bo.reshape(1, D).astype(f32)
    g_r = gamma.reshape(1, D).astype(f32)
    be_r = beta.reshape(1, D).astype(f32)

    row_grid = (R_pad // tm,)
    row_spec = pl.BlockSpec((tm, D), lambda i: (i, 0))
    w_spec = pl.BlockSpec((D, D), lambda i: (0, 0))
    vec_spec = pl.BlockSpec((1, D), lambda i: (0, 0))

    proj_cost = pl.CostEstimate(
        flops=2 * 3 * R_pad * D * D,
        transcendentals=0,
        bytes_accessed=3 * (2 * R_pad * D * 2 + D * D * 2) + 3 * D * 4,
    )
    k_p, v_p, q_p = pl.pallas_call(
        _qkv_proj_kernel,
        out_shape=tuple(jax.ShapeDtypeStruct((R_pad, D), bf) for _ in range(3)),
        grid_spec=pltpu.PrefetchScalarGridSpec(
            num_scalar_prefetch=0,
            grid=row_grid,
            in_specs=[row_spec, row_spec, row_spec,
                      w_spec, vec_spec, w_spec, vec_spec, w_spec, vec_spec],
            out_specs=[row_spec, row_spec, row_spec],
        ),
        compiler_params=pltpu.CompilerParams(dimension_semantics=("parallel",)),
        cost_estimate=proj_cost,
    )(kx, vx, qx, wk_b, bk_r, wv_b, bv_r, wq_b, bq_r)

    # replicate PyTorch `.view(B*H, -1, d)` (pure row-major reshape, incl. its head-mixing quirk)
    k_h = k_p[:R].reshape(B * H, -1, d)
    v_h = v_p[:R].reshape(B * H, -1, d)
    q_h = q_p[:R].reshape(B * H, -1, d)
    BH, Sh, _ = q_h.shape

    # ---------------- stage 2: attention over blocks of (batch*head) ----------------
    hb = min(head_tile, BH)
    BH_pad = _round_up(BH, hb)

    def pad_heads(a):
        return jnp.pad(a, ((0, BH_pad - BH), (0, 0), (0, 0)))

    q_h, k_h, v_h = pad_heads(q_h), pad_heads(k_h), pad_heads(v_h)

    head_spec = pl.BlockSpec((hb, Sh, d), lambda i: (i, 0, 0))
    attn_spec = pl.BlockSpec((hb, Sh, Sh), lambda i: (i, 0, 0))
    attn_cost = pl.CostEstimate(
        flops=2 * 2 * BH_pad * Sh * Sh * d,
        transcendentals=BH_pad * Sh * Sh,
        bytes_accessed=4 * BH_pad * Sh * d * 2 + BH_pad * Sh * Sh * 4,
    )
    ctx, attn = pl.pallas_call(
        functools.partial(_attention_kernel, scale=scale),
        out_shape=(jax.ShapeDtypeStruct((BH_pad, Sh, d), bf),
                   jax.ShapeDtypeStruct((BH_pad, Sh, Sh), f32)),
        grid_spec=pltpu.PrefetchScalarGridSpec(
            num_scalar_prefetch=0,
            grid=(BH_pad // hb,),
            in_specs=[head_spec, head_spec, head_spec],
            out_specs=[head_spec, attn_spec],
        ),
        compiler_params=pltpu.CompilerParams(dimension_semantics=("parallel",)),
        cost_estimate=attn_cost,
    )(q_h, k_h, v_h)

    attention = attn[:BH]

    # ---------------- stage 3: final linear + residual + LayerNorm ----------------
    ctx2d = pad_rows(ctx[:BH].reshape(R, D))                    # bf16
    res2d = pad_rows(query_x.reshape(R, D).astype(f32))         # residual in f32

    final_cost = pl.CostEstimate(
        flops=2 * R_pad * D * D + 10 * R_pad * D,
        transcendentals=R_pad,
        bytes_accessed=R_pad * D * 2 + D * D * 2 + 2 * R_pad * D * 4,
    )
    out2d = pl.pallas_call(
        _final_kernel,
        out_shape=jax.ShapeDtypeStruct((R_pad, D), f32),
        grid_spec=pltpu.PrefetchScalarGridSpec(
            num_scalar_prefetch=0,
            grid=row_grid,
            in_specs=[row_spec, row_spec, w_spec, vec_spec, vec_spec, vec_spec],
            out_specs=row_spec,
        ),
        compiler_params=pltpu.CompilerParams(dimension_semantics=("parallel",)),
        cost_estimate=final_cost,
    )(ctx2d, res2d, wo_b, bo_r, g_r, be_r)

    output = out2d[:R].reshape(B, S, D).astype(query_x.dtype)
    return output, attention


# --------------------------------------------------------------------------- reference
def _reference(key_x, value_x, query_x,
               wk, bk, wv, bv, wq, bq, wo, bo, gamma, beta, num_heads):
    """Pure-JAX reference with the same precision policy (bf16 matmuls, f32 accum/LN)."""
    B, S, D = query_x.shape
    H = num_heads
    d = D // H
    bf = jnp.bfloat16
    scale = float((d // H) ** (-0.5))

    def linear(x, w, b):
        y = jnp.dot(x.reshape(-1, D).astype(bf), w.astype(bf),
                    preferred_element_type=jnp.float32) + b
        return y.astype(bf)

    k = linear(key_x, wk, bk).reshape(B * H, -1, d)
    v = linear(value_x, wv, bv).reshape(B * H, -1, d)
    q = linear(query_x, wq, bq).reshape(B * H, -1, d)

    s = jnp.einsum("bqd,bkd->bqk", q, k, preferred_element_type=jnp.float32) * scale
    s = s - jnp.max(s, axis=-1, keepdims=True)
    p = jnp.exp(s)
    attn = p / jnp.sum(p, axis=-1, keepdims=True)

    ctx = jnp.einsum("bqk,bkd->bqd", attn.astype(bf), v,
                     preferred_element_type=jnp.float32).astype(bf)
    y = jnp.dot(ctx.reshape(-1, D), wo.astype(bf),
                preferred_element_type=jnp.float32) + bo
    z = query_x.reshape(-1, D) + y
    mean = jnp.mean(z, axis=-1, keepdims=True)
    cen = z - mean
    var = jnp.mean(cen * cen, axis=-1, keepdims=True)
    out = cen * (gamma * jax.lax.rsqrt(var + LN_EPS)) + beta
    return out.reshape(B, S, D), attn


# --------------------------------------------------------------------------- demo
if __name__ == "__main__":
    B, S = 2, 8
    model_dim, num_heads = 256, 4          # module defaults

    root = jax.random.PRNGKey(0)
    keys = jax.random.split(root, 12)

    key_x = jax.random.normal(keys[0], (B, S, model_dim), dtype=jnp.float32)
    value_x = jax.random.normal(keys[1], (B, S, model_dim), dtype=jnp.float32)
    query_x = jax.random.normal(keys[2], (B, S, model_dim), dtype=jnp.float32)

    def mk_w(k):
        return jax.random.normal(k, (model_dim, model_dim), dtype=jnp.float32) * 0.05

    def mk_b(k):
        return jax.random.normal(k, (model_dim,), dtype=jnp.float32) * 0.01

    wk, wv, wq, wo = mk_w(keys[3]), mk_w(keys[4]), mk_w(keys[5]), mk_w(keys[6])
    bk, bv, bq, bo = mk_b(keys[7]), mk_b(keys[8]), mk_b(keys[9]), mk_b(keys[10])
    gamma = 1.0 + 0.1 * jax.random.normal(keys[11], (model_dim,), dtype=jnp.float32)
    beta = 0.05 * jnp.ones((model_dim,), dtype=jnp.float32)

    out, attn = multi_head_attention(key_x, value_x, query_x,
                                     wk, bk, wv, bv, wq, bq, wo, bo, gamma, beta,
                                     num_heads=num_heads)
    out = jax.block_until_ready(out)
    attn = jax.block_until_ready(attn)

    ref_out, ref_attn = _reference(key_x, value_x, query_x,
                                   wk, bk, wv, bv, wq, bq, wo, bo, gamma, beta,
                                   num_heads)

    assert out.shape == (B, S, model_dim)
    assert attn.shape == (B * num_heads, S, S)
    assert jnp.allclose(out, ref_out, atol=2e-2, rtol=2e-2), "output mismatch vs reference"
    assert jnp.allclose(attn, ref_attn, atol=2e-2, rtol=2e-2), "attention mismatch vs reference"

    print("KERNEL_OK")
</pallas_src>

<mosaic_0001>
module attributes {stable_mosaic.version = 11 : i64} {
  func.func @_attention_kernel(%arg0: i32, %arg1: memref<4x8x64xbf16, #tpu.memory_space<vmem>>, %arg2: memref<4x8x64xbf16, #tpu.memory_space<vmem>>, %arg3: memref<4x8x64xbf16, #tpu.memory_space<vmem>>, %arg4: memref<4x8x64xbf16, #tpu.memory_space<vmem>>, %arg5: memref<4x8x8xf32, #tpu.memory_space<vmem>>) attributes {dimension_semantics = [#tpu.dimension_semantics<parallel>], iteration_bounds = array<i64: 2>, scalar_prefetch = 0 : i64, scratch_operands = 0 : i64, tpu.core_type = #tpu.core_type<tc>, window_params = [{transform_indices = @transform_0, window_bounds = array<i64: 4, 8, 64>}, {transform_indices = @transform_1, window_bounds = array<i64: 4, 8, 64>}, {transform_indices = @transform_2, window_bounds = array<i64: 4, 8, 64>}, {transform_indices = @transform_3, window_bounds = array<i64: 4, 8, 64>}, {transform_indices = @transform_4, window_bounds = array<i64: 4, 8, 8>}]} {
    %c0 = arith.constant 0 : index
    %c0_0 = arith.constant 0 : index
    %c0_1 = arith.constant 0 : index
    %0 = vector.load %arg1[%c0, %c0_0, %c0_1] : memref<4x8x64xbf16, #tpu.memory_space<vmem>>, vector<4x8x64xbf16>
    %c0_2 = arith.constant 0 : index
    %c0_3 = arith.constant 0 : index
    %c0_4 = arith.constant 0 : index
    %1 = vector.load %arg2[%c0_2, %c0_3, %c0_4] : memref<4x8x64xbf16, #tpu.memory_space<vmem>>, vector<4x8x64xbf16>
    %c0_5 = arith.constant 0 : index
    %c0_6 = arith.constant 0 : index
    %c0_7 = arith.constant 0 : index
    %2 = vector.load %arg3[%c0_5, %c0_6, %c0_7] : memref<4x8x64xbf16, #tpu.memory_space<vmem>>, vector<4x8x64xbf16>
    "tpu.trace_start"() <{level = 10 : i32, message = "bqd,bkd->bqk"}> : () -> ()
    %cst = arith.constant dense<0.000000e+00> : vector<4x8x8xf32>
    %3 = tpu.matmul %0, %1, %cst {dimension_numbers = #tpu.dot_dimension_numbers<[2], [2], [1], [1], [0, 0, 0, 1, 1, 1], [0], [0]>} : vector<4x8x64xbf16>, vector<4x8x64xbf16>, vector<4x8x8xf32> -> vector<4x8x8xf32>
    "tpu.trace_stop"() : () -> ()
    %cst_8 = arith.constant 2.500000e-01 : f32
    %4 = vector.broadcast %cst_8 : f32 to vector<4x8x8xf32>
    %5 = arith.mulf %3, %4 : vector<4x8x8xf32>
    %cst_9 = arith.constant dense<0xFF800000> : vector<4x8xf32>
    %6 = vector.multi_reduction <maximumf>, %5, %cst_9 [2] : vector<4x8x8xf32> to vector<4x8xf32>
    %7 = vector.shape_cast %6 : vector<4x8xf32> to vector<4x8x1xf32>
    %8 = vector.broadcast %7 : vector<4x8x1xf32> to vector<4x8x8xf32>
    %9 = arith.subf %5, %8 : vector<4x8x8xf32>
    %10 = math.exp %9 : vector<4x8x8xf32>
    %cst_10 = arith.constant dense<0.000000e+00> : vector<4x8xf32>
    %11 = vector.multi_reduction <add>, %10, %cst_10 [2] : vector<4x8x8xf32> to vector<4x8xf32>
    %12 = vector.shape_cast %11 : vector<4x8xf32> to vector<4x8x1xf32>
    %13 = vector.broadcast %12 : vector<4x8x1xf32> to vector<4x8x8xf32>
    %14 = arith.divf %10, %13 : vector<4x8x8xf32>
    %c0_11 = arith.constant 0 : index
    %c0_12 = arith.constant 0 : index
    %c0_13 = arith.constant 0 : index
    %15 = vector.load %arg5[%c0_11, %c0_12, %c0_13] : memref<4x8x8xf32, #tpu.memory_space<vmem>>, vector<4x8x8xf32>
    tpu.vector_store %arg5[%c0_11, %c0_12, %c0_13], %14 {strides = array<i32>} : memref<4x8x8xf32, #tpu.memory_space<vmem>>, vector<4x8x8xf32>,
    %16 = arith.truncf %14 : vector<4x8x8xf32> to vector<4x8x8xbf16>
    "tpu.trace_start"() <{level = 10 : i32, message = "bqk,bkd->bqd"}> : () -> ()
    %cst_14 = arith.constant dense<0.000000e+00> : vector<4x8x64xf32>
    %17 = tpu.matmul %16, %2, %cst_14 {dimension_numbers = #tpu.dot_dimension_numbers<[2], [1], [1], [2], [0, 0, 0, 1, 1, 2], [0], [0]>} : vector<4x8x8xbf16>, vector<4x8x64xbf16>, vector<4x8x64xf32> -> vector<4x8x64xf32>
    "tpu.trace_stop"() : () -> ()
    %18 = arith.truncf %17 : vector<4x8x64xf32> to vector<4x8x64xbf16>
    %c0_15 = arith.constant 0 : index
    %c0_16 = arith.constant 0 : index
    %c0_17 = arith.constant 0 : index
    %19 = vector.load %arg4[%c0_15, %c0_16, %c0_17] : memref<4x8x64xbf16, #tpu.memory_space<vmem>>, vector<4x8x64xbf16>
    tpu.vector_store %arg4[%c0_15, %c0_16, %c0_17], %18 {strides = array<i32>} : memref<4x8x64xbf16, #tpu.memory_space<vmem>>, vector<4x8x64xbf16>,
    return
  }
  func.func @transform_0(%arg0: i32) -> (i32, i32, i32) {
    %c0_i32 = arith.constant 0 : i32
    %c0_i32_0 = arith.constant 0 : i32
    %c0_i32_1 = arith.constant 0 : i32
    return %arg0, %c0_i32, %c0_i32_0 : i32, i32, i32
  }
  func.func @transform_1(%arg0: i32) -> (i32, i32, i32) {
    %c0_i32 = arith.constant 0 : i32
    %c0_i32_0 = arith.constant 0 : i32
    %c0_i32_1 = arith.constant 0 : i32
    return %arg0, %c0_i32, %c0_i32_0 : i32, i32, i32
  }
  func.func @transform_2(%arg0: i32) -> (i32, i32, i32) {
    %c0_i32 = arith.constant 0 : i32
    %c0_i32_0 = arith.constant 0 : i32
    %c0_i32_1 = arith.constant 0 : i32
    return %arg0, %c0_i32, %c0_i32_0 : i32, i32, i32
  }
  func.func @transform_3(%arg0: i32) -> (i32, i32, i32) {
    %c0_i32 = arith.constant 0 : i32
    %c0_i32_0 = arith.constant 0 : i32
    %c0_i32_1 = arith.constant 0 : i32
    return %arg0, %c0_i32, %c0_i32_0 : i32, i32, i32
  }
  func.func @transform_4(%arg0: i32) -> (i32, i32, i32) {
    %c0_i32 = arith.constant 0 : i32
    %c0_i32_0 = arith.constant 0 : i32
    %c0_i32_1 = arith.constant 0 : i32
    return %arg0, %c0_i32, %c0_i32_0 : i32, i32, i32
  }
}

module attributes {stable_mosaic.version = 11 : i64} {
  func.func @_qkv_proj_kernel(%arg0: i32, %arg1: memref<16x256xbf16, #tpu.memory_space<vmem>>, %arg2: memref<16x256xbf16, #tpu.memory_space<vmem>>, %arg3: memref<16x256xbf16, #tpu.memory_space<vmem>>, %arg4: memref<256x256xbf16, #tpu.memory_space<vmem>>, %arg5: memref<1x256xf32, #tpu.memory_space<vmem>>, %arg6: memref<256x256xbf16, #tpu.memory_space<vmem>>, %arg7: memref<1x256xf32, #tpu.memory_space<vmem>>, %arg8: memref<256x256xbf16, #tpu.memory_space<vmem>>, %arg9: memref<1x256xf32, #tpu.memory_space<vmem>>, %arg10: memref<16x256xbf16, #tpu.memory_space<vmem>>, %arg11: memref<16x256xbf16, #tpu.memory_space<vmem>>, %arg12: memref<16x256xbf16, #tpu.memory_space<vmem>>) attributes {dimension_semantics = [#tpu.dimension_semantics<parallel>], iteration_bounds = array<i64: 1>, scalar_prefetch = 0 : i64, scratch_operands = 0 : i64, tpu.core_type = #tpu.core_type<tc>, window_params = [{transform_indices = @transform_0, window_bounds = array<i64: 16, 256>}, {transform_indices = @transform_1, window_bounds = array<i64: 16, 256>}, {transform_indices = @transform_2, window_bounds = array<i64: 16, 256>}, {pipeline_mode = #tpu.pipeline_mode<synchronous>, transform_indices = @transform_3, window_bounds = array<i64: 256, 256>}, {pipeline_mode = #tpu.pipeline_mode<synchronous>, transform_indices = @transform_4, window_bounds = array<i64: 1, 256>}, {pipeline_mode = #tpu.pipeline_mode<synchronous>, transform_indices = @transform_5, window_bounds = array<i64: 256, 256>}, {pipeline_mode = #tpu.pipeline_mode<synchronous>, transform_indices = @transform_6, window_bounds = array<i64: 1, 256>}, {pipeline_mode = #tpu.pipeline_mode<synchronous>, transform_indices = @transform_7, window_bounds = array<i64: 256, 256>}, {pipeline_mode = #tpu.pipeline_mode<synchronous>, transform_indices = @transform_8, window_bounds = array<i64: 1, 256>}, {transform_indices = @transform_9, window_bounds = array<i64: 16, 256>}, {transform_indices = @transform_10, window_bounds = array<i64: 16, 256>}, {transform_indices = @transform_11, window_bounds = array<i64: 16, 256>}]} {
    %c0 = arith.constant 0 : index
    %c0_0 = arith.constant 0 : index
    %0 = vector.load %arg1[%c0, %c0_0] : memref<16x256xbf16, #tpu.memory_space<vmem>>, vector<16x256xbf16>
    %c0_1 = arith.constant 0 : index
    %c0_2 = arith.constant 0 : index
    %1 = vector.load %arg4[%c0_1, %c0_2] : memref<256x256xbf16, #tpu.memory_space<vmem>>, vector<256x256xbf16>
    %cst = arith.constant dense<0.000000e+00> : vector<16x256xf32>
    %2 = tpu.matmul %0, %1, %cst {dimension_numbers = #tpu.dot_dimension_numbers<[1], [0], [0], [1], [0, 0, 1, 1], [], []>} : vector<16x256xbf16>, vector<256x256xbf16>, vector<16x256xf32> -> vector<16x256xf32>
    %c0_3 = arith.constant 0 : index
    %c0_4 = arith.constant 0 : index
    %3 = vector.load %arg5[%c0_3, %c0_4] : memref<1x256xf32, #tpu.memory_space<vmem>>, vector<1x256xf32>
    %4 = vector.broadcast %3 : vector<1x256xf32> to vector<16x256xf32>
    %5 = arith.addf %2, %4 : vector<16x256xf32>
    %6 = arith.truncf %5 : vector<16x256xf32> to vector<16x256xbf16>
    %c0_5 = arith.constant 0 : index
    %c0_6 = arith.constant 0 : index
    %7 = vector.load %arg10[%c0_5, %c0_6] : memref<16x256xbf16, #tpu.memory_space<vmem>>, vector<16x256xbf16>
    tpu.vector_store %arg10[%c0_5, %c0_6], %6 {strides = array<i32>} : memref<16x256xbf16, #tpu.memory_space<vmem>>, vector<16x256xbf16>,
    %c0_7 = arith.constant 0 : index
    %c0_8 = arith.constant 0 : index
    %8 = vector.load %arg2[%c0_7, %c0_8] : memref<16x256xbf16, #tpu.memory_space<vmem>>, vector<16x256xbf16>
    %c0_9 = arith.constant 0 : index
    %c0_10 = arith.constant 0 : index
    %9 = vector.load %arg6[%c0_9, %c0_10] : memref<256x256xbf16, #tpu.memory_space<vmem>>, vector<256x256xbf16>
    %cst_11 = arith.constant dense<0.000000e+00> : vector<16x256xf32>
    %10 = tpu.matmul %8, %9, %cst_11 {dimension_numbers = #tpu.dot_dimension_numbers<[1], [0], [0], [1], [0, 0, 1, 1], [], []>} : vector<16x256xbf16>, vector<256x256xbf16>, vector<16x256xf32> -> vector<16x256xf32>
    %c0_12 = arith.constant 0 : index
    %c0_13 = arith.constant 0 : index
    %11 = vector.load %arg7[%c0_12, %c0_13] : memref<1x256xf32, #tpu.memory_space<vmem>>, vector<1x256xf32>
    %12 = vector.broadcast %11 : vector<1x256xf32> to vector<16x256xf32>
    %13 = arith.addf %10, %12 : vector<16x256xf32>
    %14 = arith.truncf %13 : vector<16x256xf32> to vector<16x256xbf16>
    %c0_14 = arith.constant 0 : index
    %c0_15 = arith.constant 0 : index
    %15 = vector.load %arg11[%c0_14, %c0_15] : memref<16x256xbf16, #tpu.memory_space<vmem>>, vector<16x256xbf16>
    tpu.vector_store %arg11[%c0_14, %c0_15], %14 {strides = array<i32>} : memref<16x256xbf16, #tpu.memory_space<vmem>>, vector<16x256xbf16>,
    %c0_16 = arith.constant 0 : index
    %c0_17 = arith.constant 0 : index
    %16 = vector.load %arg3[%c0_16, %c0_17] : memref<16x256xbf16, #tpu.memory_space<vmem>>, vector<16x256xbf16>
    %c0_18 = arith.constant 0 : index
    %c0_19 = arith.constant 0 : index
    %17 = vector.load %arg8[%c0_18, %c0_19] : memref<256x256xbf16, #tpu.memory_space<vmem>>, vector<256x256xbf16>
    %cst_20 = arith.constant dense<0.000000e+00> : vector<16x256xf32>
    %18 = tpu.matmul %16, %17, %cst_20 {dimension_numbers = #tpu.dot_dimension_numbers<[1], [0], [0], [1], [0, 0, 1, 1], [], []>} : vector<16x256xbf16>, vector<256x256xbf16>, vector<16x256xf32> -> vector<16x256xf32>
    %c0_21 = arith.constant 0 : index
    %c0_22 = arith.constant 0 : index
    %19 = vector.load %arg9[%c0_21, %c0_22] : memref<1x256xf32, #tpu.memory_space<vmem>>, vector<1x256xf32>
    %20 = vector.broadcast %19 : vector<1x256xf32> to vector<16x256xf32>
    %21 = arith.addf %18, %20 : vector<16x256xf32>
    %22 = arith.truncf %21 : vector<16x256xf32> to vector<16x256xbf16>
    %c0_23 = arith.constant 0 : index
    %c0_24 = arith.constant 0 : index
    %23 = vector.load %arg12[%c0_23, %c0_24] : memref<16x256xbf16, #tpu.memory_space<vmem>>, vector<16x256xbf16>
    tpu.vector_store %arg12[%c0_23, %c0_24], %22 {strides = array<i32>} : memref<16x256xbf16, #tpu.memory_space<vmem>>, vector<16x256xbf16>,
    return
  }
  func.func @transform_0(%arg0: i32) -> (i32, i32) {
    %c0_i32 = arith.constant 0 : i32
    %c0_i32_0 = arith.constant 0 : i32
    return %arg0, %c0_i32 : i32, i32
  }
  func.func @transform_1(%arg0: i32) -> (i32, i32) {
    %c0_i32 = arith.constant 0 : i32
    %c0_i32_0 = arith.constant 0 : i32
    return %arg0, %c0_i32 : i32, i32
  }
  func.func @transform_2(%arg0: i32) -> (i32, i32) {
    %c0_i32 = arith.constant 0 : i32
    %c0_i32_0 = arith.constant 0 : i32
    return %arg0, %c0_i32 : i32, i32
  }
  func.func @transform_3(%arg0: i32) -> (i32, i32) {
    %c0_i32 = arith.constant 0 : i32
    %c0_i32_0 = arith.constant 0 : i32
    %c0_i32_1 = arith.constant 0 : i32
    return %c0_i32, %c0_i32_0 : i32, i32
  }
  func.func @transform_4(%arg0: i32) -> (i32, i32) {
    %c0_i32 = arith.constant 0 : i32
    %c0_i32_0 = arith.constant 0 : i32
    %c0_i32_1 = arith.constant 0 : i32
    return %c0_i32, %c0_i32_0 : i32, i32
  }
  func.func @transform_5(%arg0: i32) -> (i32, i32) {
    %c0_i32 = arith.constant 0 : i32
    %c0_i32_0 = arith.constant 0 : i32
    %c0_i32_1 = arith.constant 0 : i32
    return %c0_i32, %c0_i32_0 : i32, i32
  }
  func.func @transform_6(%arg0: i32) -> (i32, i32) {
    %c0_i32 = arith.constant 0 : i32
    %c0_i32_0 = arith.constant 0 : i32
    %c0_i32_1 = arith.constant 0 : i32
    return %c0_i32, %c0_i32_0 : i32, i32
  }
  func.func @transform_7(%arg0: i32) -> (i32, i32) {
    %c0_i32 = arith.constant 0 : i32
    %c0_i32_0 = arith.constant 0 : i32
    %c0_i32_1 = arith.constant 0 : i32
    return %c0_i32, %c0_i32_0 : i32, i32
  }
  func.func @transform_8(%arg0: i32) -> (i32, i32) {
    %c0_i32 = arith.constant 0 : i32
    %c0_i32_0 = arith.constant 0 : i32
    %c0_i32_1 = arith.constant 0 : i32
    return %c0_i32, %c0_i32_0 : i32, i32
  }
  func.func @transform_9(%arg0: i32) -> (i32, i32) {
    %c0_i32 = arith.constant 0 : i32
    %c0_i32_0 = arith.constant 0 : i32
    return %arg0, %c0_i32 : i32, i32
  }
  func.func @transform_10(%arg0: i32) -> (i32, i32) {
    %c0_i32 = arith.constant 0 : i32
    %c0_i32_0 = arith.constant 0 : i32
    return %arg0, %c0_i32 : i32, i32
  }
  func.func @transform_11(%arg0: i32) -> (i32, i32) {
    %c0_i32 = arith.constant 0 : i32
    %c0_i32_0 = arith.constant 0 : i32
    return %arg0, %c0_i32 : i32, i32
  }
}

module attributes {stable_mosaic.version = 11 : i64} {
  func.func @_final_kernel(%arg0: i32, %arg1: memref<16x256xbf16, #tpu.memory_space<vmem>>, %arg2: memref<16x256xf32, #tpu.memory_space<vmem>>, %arg3: memref<256x256xbf16, #tpu.memory_space<vmem>>, %arg4: memref<1x256xf32, #tpu.memory_space<vmem>>, %arg5: memref<1x256xf32, #tpu.memory_space<vmem>>, %arg6: memref<1x256xf32, #tpu.memory_space<vmem>>, %arg7: memref<16x256xf32, #tpu.memory_space<vmem>>) attributes {dimension_semantics = [#tpu.dimension_semantics<parallel>], iteration_bounds = array<i64: 1>, scalar_prefetch = 0 : i64, scratch_operands = 0 : i64, tpu.core_type = #tpu.core_type<tc>, window_params = [{transform_indices = @transform_0, window_bounds = array<i64: 16, 256>}, {transform_indices = @transform_1, window_bounds = array<i64: 16, 256>}, {pipeline_mode = #tpu.pipeline_mode<synchronous>, transform_indices = @transform_2, window_bounds = array<i64: 256, 256>}, {pipeline_mode = #tpu.pipeline_mode<synchronous>, transform_indices = @transform_3, window_bounds = array<i64: 1, 256>}, {pipeline_mode = #tpu.pipeline_mode<synchronous>, transform_indices = @transform_4, window_bounds = array<i64: 1, 256>}, {pipeline_mode = #tpu.pipeline_mode<synchronous>, transform_indices = @transform_5, window_bounds = array<i64: 1, 256>}, {transform_indices = @transform_6, window_bounds = array<i64: 16, 256>}]} {
    %c0 = arith.constant 0 : index
    %c0_0 = arith.constant 0 : index
    %0 = vector.load %arg1[%c0, %c0_0] : memref<16x256xbf16, #tpu.memory_space<vmem>>, vector<16x256xbf16>
    %c0_1 = arith.constant 0 : index
    %c0_2 = arith.constant 0 : index
    %1 = vector.load %arg3[%c0_1, %c0_2] : memref<256x256xbf16, #tpu.memory_space<vmem>>, vector<256x256xbf16>
    %cst = arith.constant dense<0.000000e+00> : vector<16x256xf32>
    %2 = tpu.matmul %0, %1, %cst {dimension_numbers = #tpu.dot_dimension_numbers<[1], [0], [0], [1], [0, 0, 1, 1], [], []>} : vector<16x256xbf16>, vector<256x256xbf16>, vector<16x256xf32> -> vector<16x256xf32>
    %c0_3 = arith.constant 0 : index
    %c0_4 = arith.constant 0 : index
    %3 = vector.load %arg2[%c0_3, %c0_4] : memref<16x256xf32, #tpu.memory_space<vmem>>, vector<16x256xf32>
    %c0_5 = arith.constant 0 : index
    %c0_6 = arith.constant 0 : index
    %4 = vector.load %arg4[%c0_5, %c0_6] : memref<1x256xf32, #tpu.memory_space<vmem>>, vector<1x256xf32>
    %5 = vector.broadcast %4 : vector<1x256xf32> to vector<16x256xf32>
    %6 = arith.addf %2, %5 : vector<16x256xf32>
    %7 = arith.addf %3, %6 : vector<16x256xf32>
    %cst_7 = arith.constant dense<0.000000e+00> : vector<16xf32>
    %8 = vector.multi_reduction <add>, %7, %cst_7 [1] : vector<16x256xf32> to vector<16xf32>
    %9 = vector.shape_cast %8 : vector<16xf32> to vector<16x1xf32>
    %cst_8 = arith.constant 2.560000e+02 : f32
    %10 = vector.broadcast %cst_8 : f32 to vector<16x1xf32>
    %11 = arith.divf %9, %10 : vector<16x1xf32>
    %12 = vector.broadcast %11 : vector<16x1xf32> to vector<16x256xf32>
    %13 = arith.subf %7, %12 : vector<16x256xf32>
    %14 = arith.mulf %13, %13 : vector<16x256xf32>
    %cst_9 = arith.constant dense<0.000000e+00> : vector<16xf32>
    %15 = vector.multi_reduction <add>, %14, %cst_9 [1] : vector<16x256xf32> to vector<16xf32>
    %16 = vector.shape_cast %15 : vector<16xf32> to vector<16x1xf32>
    %cst_10 = arith.constant 2.560000e+02 : f32
    %17 = vector.broadcast %cst_10 : f32 to vector<16x1xf32>
    %18 = arith.divf %16, %17 : vector<16x1xf32>
    %c0_11 = arith.constant 0 : index
    %c0_12 = arith.constant 0 : index
    %19 = vector.load %arg5[%c0_11, %c0_12] : memref<1x256xf32, #tpu.memory_space<vmem>>, vector<1x256xf32>
    %cst_13 = arith.constant 9.99999974E-6 : f32
    %20 = vector.broadcast %cst_13 : f32 to vector<16x1xf32>
    %21 = arith.addf %18, %20 : vector<16x1xf32>
    %22 = math.rsqrt %21 : vector<16x1xf32>
    %23 = vector.broadcast %19 : vector<1x256xf32> to vector<16x256xf32>
    %24 = vector.broadcast %22 : vector<16x1xf32> to vector<16x256xf32>
    %25 = arith.mulf %23, %24 : vector<16x256xf32>
    %26 = arith.mulf %13, %25 : vector<16x256xf32>
    %c0_14 = arith.constant 0 : index
    %c0_15 = arith.constant 0 : index
    %27 = vector.load %arg6[%c0_14, %c0_15] : memref<1x256xf32, #tpu.memory_space<vmem>>, vector<1x256xf32>
    %28 = vector.broadcast %27 : vector<1x256xf32> to vector<16x256xf32>
    %29 = arith.addf %26, %28 : vector<16x256xf32>
    %c0_16 = arith.constant 0 : index
    %c0_17 = arith.constant 0 : index
    %30 = vector.load %arg7[%c0_16, %c0_17] : memref<16x256xf32, #tpu.memory_space<vmem>>, vector<16x256xf32>
    tpu.vector_store %arg7[%c0_16, %c0_17], %29 {strides = array<i32>} : memref<16x256xf32, #tpu.memory_space<vmem>>, vector<16x256xf32>,
    return
  }
  func.func @transform_0(%arg0: i32) -> (i32, i32) {
    %c0_i32 = arith.constant 0 : i32
    %c0_i32_0 = arith.constant 0 : i32
    return %arg0, %c0_i32 : i32, i32
  }
  func.func @transform_1(%arg0: i32) -> (i32, i32) {
    %c0_i32 = arith.constant 0 : i32
    %c0_i32_0 = arith.constant 0 : i32
    return %arg0, %c0_i32 : i32, i32
  }
  func.func @transform_2(%arg0: i32) -> (i32, i32) {
    %c0_i32 = arith.constant 0 : i32
    %c0_i32_0 = arith.constant 0 : i32
    %c0_i32_1 = arith.constant 0 : i32
    return %c0_i32, %c0_i32_0 : i32, i32
  }
  func.func @transform_3(%arg0: i32) -> (i32, i32) {
    %c0_i32 = arith.constant 0 : i32
    %c0_i32_0 = arith.constant 0 : i32
    %c0_i32_1 = arith.constant 0 : i32
    return %c0_i32, %c0_i32_0 : i32, i32
  }
  func.func @transform_4(%arg0: i32) -> (i32, i32) {
    %c0_i32 = arith.constant 0 : i32
    %c0_i32_0 = arith.constant 0 : i32
    %c0_i32_1 = arith.constant 0 : i32
    return %c0_i32, %c0_i32_0 : i32, i32
  }
  func.func @transform_5(%arg0: i32) -> (i32, i32) {
    %c0_i32 = arith.constant 0 : i32
    %c0_i32_0 = arith.constant 0 : i32
    %c0_i32_1 = arith.constant 0 : i32
    return %c0_i32, %c0_i32_0 : i32, i32
  }
  func.func @transform_6(%arg0: i32) -> (i32, i32) {
    %c0_i32 = arith.constant 0 : i32
    %c0_i32_0 = arith.constant 0 : i32
    return %arg0, %c0_i32 : i32, i32
  }
}

</mosaic_0001>

<llo_original>
// kernel: multi_head_attention.4
$region0: #{multi_head_attention.4}
  #allocation0 [shape = 'u32[]', space=smem, size = 0x4, offset = 0x4, fixed_abs, tag = 'smem constant byte address 0x4 - core index']
  #allocation1 [shape = 'u32[144,128]{1,0:T(1,128)}', space=vmem, size = 0x12000, scoped, tag = 'internal scratch']
  %s0 = inlined_call_operand.vmem [shape: bf16[8,8,64], index: 0, kind: input, shape index: {}]
  %s1 = inlined_call_operand.vmem [shape: bf16[8,8,64], index: 1, kind: input, shape index: {}]
  %s2 = inlined_call_operand.vmem [shape: bf16[8,8,64], index: 2, kind: input, shape index: {}]
  %s3 = inlined_call_operand.vmem [shape: bf16[8,8,64], index: 3, kind: output, shape index: {0}]
  %s4 = inlined_call_operand.hbm [shape: f32[8,8,8], index: 4, kind: output, shape index: {1}]
  %5 = xla_tuple %s3, %s4
  %s6 = sld [smem:[#allocation0]]
  $region53: #{multi_head_attention.4} parent=0
    _
  %s8 = ssub.s32 1, %s6
  %s9 = scalar_select 0, %s8, %s6
  $region1: #{multi_head_attention.4} parent=0
    #allocation2 [shape = 'u8[32768]{0}', space=vmem, size = 0x8000, scoped, tag = 'output window, operand 1']
    #allocation3 [shape = 's32[2]{0}', space=sflag, size = 0x8, scoped, tag = 'scoped memory for multi_head_attention.4']
    %10 = vsyncpa [#allocation3], 0
    %s11 = scalar_lea.sflag [#allocation3], 1
    %12 = vsyncpa %s11, 0
    loop: start=0, step=1, limit=4
    $region2: #{multi_head_attention.4} parent=1 // loop_pre_header
      _
    $region3: #{multi_head_attention.4} parent=1 // loop_header
      %s14 = sphi 0, %s18
      %p15 = scmp.ge.s32.totalorder %s14, 4
      %s24 = sphi 0, %s26
      %s27 = sphi 0, %s24
      %s28 = sphi 0, %s27
      %s44 = sphi 0, %s28
      %s50 = sphi 0, %s52
      %s53 = sphi 0, %s50
      %s54 = sphi 0, %s53
      %s70 = sphi 0, %s54
      %s76 = sphi 0, %s78
      %s79 = sphi 0, %s76
      %s80 = sphi 0, %s79
      %s96 = sphi 0, %s80
      %s102 = sphi 0, %s104
      %s105 = sphi 0, %s102
      %s106 = sphi 0, %s105
      %s122 = sphi 0, %s106
      %s128 = sphi 0, %s130
      %s131 = sphi 0, %s128
      %s132 = sphi 0, %s131
      %s148 = sphi 0, %s132
    $region4: #{multi_head_attention.4} parent=1 // loop_header_branch
      %17 = sbr.rel (%p15) target = $region8
    $region5: #{multi_head_attention.4} parent=1 // loop_body
      %s19 = ssub.s32 %s14, 1
      %s20 = ssub.s32 %s14, 2
      %s21 = sadd.s32 %s14, 1
      %s22 = ssub.s32 %s14, %s21
      %p23 = scmp.eq.s32.totalorder %s22, 0
      %s25 = sadd.s32 %s24, 1
      %s26 = scalar_select %p23, %s24, %s25
      %p29 = pneg %p23
      %p30 = scmp.eq.s32.totalorder %s14, 1
      %p31 = por %p29, %p30
      %p32 = scmp.ne.s32.totalorder %s24, %s27
      %p33 = scmp.eq.s32.totalorder %s14, 0
      %p34 = por %p32, %p33
      %p35 = scmp.ne.s32.totalorder %s24, %s27
      %p36 = scmp.eq.s32.totalorder %s19, 1
      %p37 = por %p35, %p36
      %p38 = scmp.ne.s32.totalorder %s27, %s28
      %p39 = scmp.eq.s32.totalorder %s19, 0
      %p40 = por %p38, %p39
      %p41 = scmp.ne.s32.totalorder %s27, %s28
      %p42 = scmp.eq.s32.totalorder %s20, 1
      %p43 = por %p41, %p42
      %p45 = scmp.ne.s32.totalorder %s28, %s44
      %p46 = scmp.eq.s32.totalorder %s20, 0
      %p47 = por %p45, %p46
      %s48 = ssub.s32 %s14, %s21
      %p49 = scmp.eq.s32.totalorder %s48, 0
      %s51 = sadd.s32 %s50, 1
      %s52 = scalar_select %p49, %s50, %s51
      %p55 = pneg %p49
      %p56 = scmp.eq.s32.totalorder %s14, 1
      %p57 = por %p55, %p56
      %p58 = scmp.ne.s32.totalorder %s50, %s53
      %p59 = scmp.eq.s32.totalorder %s14, 0
      %p60 = por %p58, %p59
      %p61 = scmp.ne.s32.totalorder %s50, %s53
      %p62 = scmp.eq.s32.totalorder %s19, 1
      %p63 = por %p61, %p62
      %p64 = scmp.ne.s32.totalorder %s53, %s54
      %p65 = scmp.eq.s32.totalorder %s19, 0
      %p66 = por %p64, %p65
      %p67 = scmp.ne.s32.totalorder %s53, %s54
      %p68 = scmp.eq.s32.totalorder %s20, 1
      %p69 = por %p67, %p68
      %p71 = scmp.ne.s32.totalorder %s54, %s70
      %p72 = scmp.eq.s32.totalorder %s20, 0
      %p73 = por %p71, %p72
      %s74 = ssub.s32 %s14, %s21
      %p75 = scmp.eq.s32.totalorder %s74, 0
      %s77 = sadd.s32 %s76, 1
      %s78 = scalar_select %p75, %s76, %s77
      %p81 = pneg %p75
      %p82 = scmp.eq.s32.totalorder %s14, 1
      %p83 = por %p81, %p82
      %p84 = scmp.ne.s32.totalorder %s76, %s79
      %p85 = scmp.eq.s32.totalorder %s14, 0
      %p86 = por %p84, %p85
      %p87 = scmp.ne.s32.totalorder %s76, %s79
      %p88 = scmp.eq.s32.totalorder %s19, 1
      %p89 = por %p87, %p88
      %p90 = scmp.ne.s32.totalorder %s79, %s80
      %p91 = scmp.eq.s32.totalorder %s19, 0
      %p92 = por %p90, %p91
      %p93 = scmp.ne.s32.totalorder %s79, %s80
      %p94 = scmp.eq.s32.totalorder %s20, 1
      %p95 = por %p93, %p94
      %p97 = scmp.ne.s32.totalorder %s80, %s96
      %p98 = scmp.eq.s32.totalorder %s20, 0
      %p99 = por %p97, %p98
      %s100 = ssub.s32 %s14, %s21
      %p101 = scmp.eq.s32.totalorder %s100, 0
      %s103 = sadd.s32 %s102, 1
      %s104 = scalar_select %p101, %s102, %s103
      %p107 = pneg %p101
      %p108 = scmp.eq.s32.totalorder %s14, 1
      %p109 = por %p107, %p108
      %p110 = scmp.ne.s32.totalorder %s102, %s105
      %p111 = scmp.eq.s32.totalorder %s14, 0
      %p112 = por %p110, %p111
      %p113 = scmp.ne.s32.totalorder %s102, %s105
      %p114 = scmp.eq.s32.totalorder %s19, 1
      %p115 = por %p113, %p114
      %p116 = scmp.ne.s32.totalorder %s105, %s106
      %p117 = scmp.eq.s32.totalorder %s19, 0
      %p118 = por %p116, %p117
      %p119 = scmp.ne.s32.totalorder %s105, %s106
      %p120 = scmp.eq.s32.totalorder %s20, 1
      %p121 = por %p119, %p120
      %p123 = scmp.ne.s32.totalorder %s106, %s122
      %p124 = scmp.eq.s32.totalorder %s20, 0
      %p125 = por %p123, %p124
      %s126 = ssub.s32 %s14, %s21
      %p127 = scmp.eq.s32.totalorder %s126, 0
      %s129 = sadd.s32 %s128, 1
      %s130 = scalar_select %p127, %s128, %s129
      %p133 = pneg %p127
      %p134 = scmp.eq.s32.totalorder %s14, 1
      %p135 = por %p133, %p134
      %p136 = scmp.ne.s32.totalorder %s128, %s131
      %p137 = scmp.eq.s32.totalorder %s14, 0
      %p138 = por %p136, %p137
      %p139 = scmp.ne.s32.totalorder %s128, %s131
      %p140 = scmp.eq.s32.totalorder %s19, 1
      %p141 = por %p139, %p140
      %p142 = scmp.ne.s32.totalorder %s131, %s132
      %p143 = scmp.eq.s32.totalorder %s19, 0
      %p144 = por %p142, %p143
      %p145 = scmp.ne.s32.totalorder %s131, %s132
      %p146 = scmp.eq.s32.totalorder %s20, 1
      %p147 = por %p145, %p146
      %p149 = scmp.ne.s32.totalorder %s132, %s148
      %p150 = scmp.eq.s32.totalorder %s20, 0
      %p151 = por %p149, %p150
      %p152 = scmp.le.s32.totalorder 1, %s14
      %p153 = scmp.lt.s32.totalorder %s14, 3
      %p154 = pnand %p152, %p153
      %p155 = pneg %p154
      // Predicated region
      $region9: #{multi_head_attention.4} parent=5 // pred_check
        _
      $region10: #{multi_head_attention.4} parent=5 // pred_check_branch
        %157 = sbr.rel (%p154) target = $region12
      $region11: #{multi_head_attention.4} parent=5 // pred_region
        %s158 = ssub.s32 %s14, 1
      $region12: #{multi_head_attention.4} parent=5 // pred_fallthru
        _
      %p159 = scmp.lt.s32.totalorder %s14, 2
      // Predicated region
      $region13: #{multi_head_attention.4} parent=5 // pred_check
        %p160 = pneg %p159
      $region14: #{multi_head_attention.4} parent=5 // pred_check_branch
        %162 = sbr.rel (%p160) target = $region16
      $region15: #{multi_head_attention.4} parent=5 // pred_region
        // Predicated region
        $region17: #{multi_head_attention.4} parent=15 // pred_check
          %p163 = pneg %p34
        $region18: #{multi_head_attention.4} parent=15 // pred_check_branch
          %165 = sbr.rel (%p163) target = $region20
        $region19: #{multi_head_attention.4} parent=15 // pred_region
          %s166 = smul.u32 4, %s14
          %p167 = scmp.lt.s32.totalorder %s166, 7
          %s168 = scalar_select %p167, %s166, 7
          %s169 = smul.addr %s168, 4
          %s170 = scalar_lea.vmem %s0, %s169
          %s171 = smul.u32 4, %s14
        $region20: #{multi_head_attention.4} parent=15 // pred_fallthru
          _
        // Predicated region
        $region21: #{multi_head_attention.4} parent=15 // pred_check
          %p172 = pneg %p60
        $region22: #{multi_head_attention.4} parent=15 // pred_check_branch
          %174 = sbr.rel (%p172) target = $region24
        $region23: #{multi_head_attention.4} parent=15 // pred_region
          %s175 = smul.u32 4, %s14
          %p176 = scmp.lt.s32.totalorder %s175, 7
          %s177 = scalar_select %p176, %s175, 7
          %s178 = smul.addr %s177, 4
          %s179 = scalar_lea.vmem %s1, %s178
          %s180 = smul.u32 4, %s14
        $region24: #{multi_head_attention.4} parent=15 // pred_fallthru
          _
        // Predicated region
        $region25: #{multi_head_attention.4} parent=15 // pred_check
          %p181 = pneg %p86
        $region26: #{multi_head_attention.4} parent=15 // pred_check_branch
          %183 = sbr.rel (%p181) target = $region28
        $region27: #{multi_head_attention.4} parent=15 // pred_region
          %s184 = smul.u32 4, %s14
          %p185 = scmp.lt.s32.totalorder %s184, 7
          %s186 = scalar_select %p185, %s184, 7
          %s187 = smul.addr %s186, 4
          %s188 = scalar_lea.vmem %s2, %s187
          %s189 = smul.u32 4, %s14
        $region28: #{multi_head_attention.4} parent=15 // pred_fallthru
          _
      $region16: #{multi_head_attention.4} parent=5 // pred_fallthru
        _
      %p190 = scmp.le.s32.totalorder 1, %s14
      %p191 = scmp.lt.s32.totalorder %s14, 3
      %p192 = pnand %p190, %p191
      %p193 = pneg %p192
      // Predicated region
      $region29: #{multi_head_attention.4} parent=5 // pred_check
        _
      $region30: #{multi_head_attention.4} parent=5 // pred_check_branch
        %195 = sbr.rel (%p192) target = $region32
      $region31: #{multi_head_attention.4} parent=5 // pred_region
        %s196 = ssub.s32 %s14, 1
        %s197 = smul.u32 4, %s19
        %p198 = scmp.lt.s32.totalorder %s197, 7
        %s199 = scalar_select %p198, %s197, 7
        %s200 = smul.addr %s199, 4
        %s201 = scalar_lea.vmem %s0, %s200
        %p202 = pneg %p40
        %p203 = pneg %p37
        %s204 = smul.u32 4, %s19
        %p205 = scmp.lt.s32.totalorder %s204, 7
        %s206 = scalar_select %p205, %s204, 7
        %s207 = smul.addr %s206, 4
        %s208 = scalar_lea.vmem %s1, %s207
        %p209 = pneg %p66
        %p210 = pneg %p63
        %s211 = smul.u32 4, %s19
        %p212 = scmp.lt.s32.totalorder %s211, 7
        %s213 = scalar_select %p212, %s211, 7
        %s214 = smul.addr %s213, 4
        %s215 = scalar_lea.vmem %s2, %s214
        %p216 = pneg %p92
        %p217 = pneg %p89
        %p218 = pneg %p118
        %p219 = pneg %p115
        %s220 = smul.u32 4, %s19
        %p221 = scmp.lt.s32.totalorder %s220, 7
        %s222 = scalar_select %p221, %s220, 7
        %s223 = smul.addr %s222, 4
        %s224 = scalar_lea.vmem %s3, %s223
        %p225 = pneg %p144
        %p226 = pneg %p141
        %s227 = sand.u32 %s131, 1
        %s228 = scalar_lea.sflag [#allocation3], %s227
        %s229 = sand.u32 %s131, 1
        %s230 = smul.addr %s229, 32
        %s231 = scalar_lea.vmem [#allocation2], %s230
        %s232 = smul.u32 4, %s19
        %p233 = scmp.lt.s32.totalorder %s232, 7
        %s234 = scalar_select %p233, %s232, 7
        %s235 = smul.addr %s234, 4
        %s236 = scalar_lea.vmem %s0, %s235
        %s237 = smul.u32 4, %s19
        %s238 = smul.u32 4, %s19
        %p239 = scmp.lt.s32.totalorder %s238, 7
        %s240 = scalar_select %p239, %s238, 7
        %s241 = smul.addr %s240, 4
        %s242 = scalar_lea.vmem %s1, %s241
        %s243 = smul.u32 4, %s19
        %s244 = smul.u32 4, %s19
        %p245 = scmp.lt.s32.totalorder %s244, 7
        %s246 = scalar_select %p245, %s244, 7
        %s247 = smul.addr %s246, 4
        %s248 = scalar_lea.vmem %s2, %s247
        %s249 = smul.u32 4, %s19
        %s250 = smul.u32 4, %s19
        %p251 = scmp.lt.s32.totalorder %s250, 7
        %s252 = scalar_select %p251, %s250, 7
        %s253 = smul.addr %s252, 4
        %s254 = scalar_lea.vmem %s3, %s253
        %s255 = smul.u32 4, %s19
        %s256 = smul.u32 4, %s19
        %v258 = vld [vmem:[%s236] sm:$0xf]
        %v259 = vld [vmem:[%s236 + $0x4] sm:$0xf]
        %v260 = vld [vmem:[%s236 + $0x8] sm:$0xf]
        %v261 = vld [vmem:[%s236 + $0xc] sm:$0xf]
        %v262 = vld [vmem:[%s242] sm:$0xf]
        %v263 = vld [vmem:[%s242 + $0x4] sm:$0xf]
        %v264 = vld [vmem:[%s242 + $0x8] sm:$0xf]
        %v265 = vld [vmem:[%s242 + $0xc] sm:$0xf]
        %v266 = vld [vmem:[%s248] sm:$0xf]
        %v267 = vld [vmem:[%s248 + $0x4] sm:$0xf]
        %v268 = vld [vmem:[%s248 + $0x8] sm:$0xf]
        %v269 = vld [vmem:[%s248 + $0xc] sm:$0xf]
        %vm270 = vcmask 523264
        %v272 = vsel %vm270, %v258, 0
        %v275 = vsel %vm270, %v262, 0
        %277 = vmatprep.subr.bf16.mxu0 0
        %278 = vmatpush1.bf16.xpose.msra.mxu0 %v275
        %279 = vmatprep.subr.bf16.mxu0 0
        %280 = vmatpush1.bf16.xpose.msra.mxu0 0
        %281 = vmatprep.subr.bf16.mxu0 0
        %282 = vmatpush1.bf16.xpose.msra.mxu0 0
        %283 = vmatprep.subr.bf16.mxu0 0
        %284 = vmatpush1.bf16.xpose.msra.mxu0 0
        %285 = vmatprep.subr.bf16.mxu0 0
        %286 = vmatpush1.bf16.xpose.msra.mxu0 0
        %287 = vmatprep.subr.bf16.mxu0 0
        %288 = vmatpush1.bf16.xpose.msra.mxu0 0
        %289 = vmatprep.subr.bf16.mxu0 0
        %290 = vmatpush1.bf16.xpose.msra.mxu0 0
        %291 = vmatprep.subr.bf16.mxu0 0
        %292 = vmatpush1.bf16.xpose.msra.mxu0 0
        %293 = vmatprep.subr.bf16.mxu0 0
        %294 = vmatpush1.bf16.xpose.msra.mxu0 0
        %295 = vmatprep.subr.bf16.mxu0 0
        %296 = vmatpush1.bf16.xpose.msra.mxu0 0
        %297 = vmatprep.subr.bf16.mxu0 0
        %298 = vmatpush1.bf16.xpose.msra.mxu0 0
        %299 = vmatprep.subr.bf16.mxu0 0
        %300 = vmatpush1.bf16.xpose.msra.mxu0 0
        %301 = vmatprep.subr.bf16.mxu0 0
        %302 = vmatpush1.bf16.xpose.msra.mxu0 0
        %303 = vmatprep.subr.bf16.mxu0 0
        %304 = vmatpush1.bf16.xpose.msra.mxu0 0
        %305 = vmatprep.subr.bf16.mxu0 0
        %306 = vmatpush1.bf16.xpose.msra.mxu0 0
        %307 = vmatprep.subr.bf16.mxu0 0
        %308 = vmatpush1.bf16.xpose.msra.mxu0 0
        %309 = vmatprep.mubr.bf16.mxu0 0
        %310 = vmatmul.mubr.bf16.gmra.mrb[0].mxu0 %v272
        %v311 = vpop.f32.mrb[0].mxu0
        %v312 = vadd.f32 0.0, %v311
        %v313 = vpop.f32.mrb[0].mxu0
        %v314 = vpop.f32.mrb[0].mxu0
        %v315 = vpop.f32.mrb[0].mxu0
        %316 = vdwg.mxu0
        %v318 = vsel %vm270, %v259, 0
        %v321 = vsel %vm270, %v263, 0
        %323 = vmatprep.subr.bf16.mxu0 0
        %324 = vmatpush1.bf16.xpose.msra.mxu0 %v321
        %325 = vmatprep.subr.bf16.mxu0 0
        %326 = vmatpush1.bf16.xpose.msra.mxu0 0
        %327 = vmatprep.subr.bf16.mxu0 0
        %328 = vmatpush1.bf16.xpose.msra.mxu0 0
        %329 = vmatprep.subr.bf16.mxu0 0
        %330 = vmatpush1.bf16.xpose.msra.mxu0 0
        %331 = vmatprep.subr.bf16.mxu0 0
        %332 = vmatpush1.bf16.xpose.msra.mxu0 0
        %333 = vmatprep.subr.bf16.mxu0 0
        %334 = vmatpush1.bf16.xpose.msra.mxu0 0
        %335 = vmatprep.subr.bf16.mxu0 0
        %336 = vmatpush1.bf16.xpose.msra.mxu0 0
        %337 = vmatprep.subr.bf16.mxu0 0
        %338 = vmatpush1.bf16.xpose.msra.mxu0 0
        %339 = vmatprep.subr.bf16.mxu0 0
        %340 = vmatpush1.bf16.xpose.msra.mxu0 0
        %341 = vmatprep.subr.bf16.mxu0 0
        %342 = vmatpush1.bf16.xpose.msra.mxu0 0
        %343 = vmatprep.subr.bf16.mxu0 0
        %344 = vmatpush1.bf16.xpose.msra.mxu0 0
        %345 = vmatprep.subr.bf16.mxu0 0
        %346 = vmatpush1.bf16.xpose.msra.mxu0 0
        %347 = vmatprep.subr.bf16.mxu0 0
        %348 = vmatpush1.bf16.xpose.msra.mxu0 0
        %349 = vmatprep.subr.bf16.mxu0 0
        %350 = vmatpush1.bf16.xpose.msra.mxu0 0
        %351 = vmatprep.subr.bf16.mxu0 0
        %352 = vmatpush1.bf16.xpose.msra.mxu0 0
        %353 = vmatprep.subr.bf16.mxu0 0
        %354 = vmatpush1.bf16.xpose.msra.mxu0 0
        %355 = vmatprep.mubr.bf16.mxu0 0
        %356 = vmatmul.mubr.bf16.gmra.mrb[0].mxu0 %v318
        %v357 = vpop.f32.mrb[0].mxu0
        %v358 = vadd.f32 0.0, %v357
        %v359 = vpop.f32.mrb[0].mxu0
        %v360 = vpop.f32.mrb[0].mxu0
        %v361 = vpop.f32.mrb[0].mxu0
        %362 = vdwg.mxu0
        %v364 = vsel %vm270, %v260, 0
        %v367 = vsel %vm270, %v264, 0
        %369 = vmatprep.subr.bf16.mxu0 0
        %370 = vmatpush1.bf16.xpose.msra.mxu0 %v367
        %371 = vmatprep.subr.bf16.mxu0 0
        %372 = vmatpush1.bf16.xpose.msra.mxu0 0
        %373 = vmatprep.subr.bf16.mxu0 0
        %374 = vmatpush1.bf16.xpose.msra.mxu0 0
        %375 = vmatprep.subr.bf16.mxu0 0
        %376 = vmatpush1.bf16.xpose.msra.mxu0 0
        %377 = vmatprep.subr.bf16.mxu0 0
        %378 = vmatpush1.bf16.xpose.msra.mxu0 0
        %379 = vmatprep.subr.bf16.mxu0 0
        %380 = vmatpush1.bf16.xpose.msra.mxu0 0
        %381 = vmatprep.subr.bf16.mxu0 0
        %382 = vmatpush1.bf16.xpose.msra.mxu0 0
        %383 = vmatprep.subr.bf16.mxu0 0
        %384 = vmatpush1.bf16.xpose.msra.mxu0 0
        %385 = vmatprep.subr.bf16.mxu0 0
        %386 = vmatpush1.bf16.xpose.msra.mxu0 0
        %387 = vmatprep.subr.bf16.mxu0 0
        %388 = vmatpush1.bf16.xpose.msra.mxu0 0
        %389 = vmatprep.subr.bf16.mxu0 0
        %390 = vmatpush1.bf16.xpose.msra.mxu0 0
        %391 = vmatprep.subr.bf16.mxu0 0
        %392 = vmatpush1.bf16.xpose.msra.mxu0 0
        %393 = vmatprep.subr.bf16.mxu0 0
        %394 = vmatpush1.bf16.xpose.msra.mxu0 0
        %395 = vmatprep.subr.bf16.mxu0 0
        %396 = vmatpush1.bf16.xpose.msra.mxu0 0
        %397 = vmatprep.subr.bf16.mxu0 0
        %398 = vmatpush1.bf16.xpose.msra.mxu0 0
        %399 = vmatprep.subr.bf16.mxu0 0
        %400 = vmatpush1.bf16.xpose.msra.mxu0 0
        %401 = vmatprep.mubr.bf16.mxu0 0
        %402 = vmatmul.mubr.bf16.gmra.mrb[0].mxu0 %v364
        %v403 = vpop.f32.mrb[0].mxu0
        %v404 = vadd.f32 0.0, %v403
        %v405 = vpop.f32.mrb[0].mxu0
        %v406 = vpop.f32.mrb[0].mxu0
        %v407 = vpop.f32.mrb[0].mxu0
        %408 = vdwg.mxu0
        %v410 = vsel %vm270, %v261, 0
        %v413 = vsel %vm270, %v265, 0
        %415 = vmatprep.subr.bf16.mxu0 0
        %416 = vmatpush1.bf16.xpose.msra.mxu0 %v413
        %417 = vmatprep.subr.bf16.mxu0 0
        %418 = vmatpush1.bf16.xpose.msra.mxu0 0
        %419 = vmatprep.subr.bf16.mxu0 0
        %420 = vmatpush1.bf16.xpose.msra.mxu0 0
        %421 = vmatprep.subr.bf16.mxu0 0
        %422 = vmatpush1.bf16.xpose.msra.mxu0 0
        %423 = vmatprep.subr.bf16.mxu0 0
        %424 = vmatpush1.bf16.xpose.msra.mxu0 0
        %425 = vmatprep.subr.bf16.mxu0 0
        %426 = vmatpush1.bf16.xpose.msra.mxu0 0
        %427 = vmatprep.subr.bf16.mxu0 0
        %428 = vmatpush1.bf16.xpose.msra.mxu0 0
        %429 = vmatprep.subr.bf16.mxu0 0
        %430 = vmatpush1.bf16.xpose.msra.mxu0 0
        %431 = vmatprep.subr.bf16.mxu0 0
        %432 = vmatpush1.bf16.xpose.msra.mxu0 0
        %433 = vmatprep.subr.bf16.mxu0 0
        %434 = vmatpush1.bf16.xpose.msra.mxu0 0
        %435 = vmatprep.subr.bf16.mxu0 0
        %436 = vmatpush1.bf16.xpose.msra.mxu0 0
        %437 = vmatprep.subr.bf16.mxu0 0
        %438 = vmatpush1.bf16.xpose.msra.mxu0 0
        %439 = vmatprep.subr.bf16.mxu0 0
        %440 = vmatpush1.bf16.xpose.msra.mxu0 0
        %441 = vmatprep.subr.bf16.mxu0 0
        %442 = vmatpush1.bf16.xpose.msra.mxu0 0
        %443 = vmatprep.subr.bf16.mxu0 0
        %444 = vmatpush1.bf16.xpose.msra.mxu0 0
        %445 = vmatprep.subr.bf16.mxu0 0
        %446 = vmatpush1.bf16.xpose.msra.mxu0 0
        %447 = vmatprep.mubr.bf16.mxu0 0
        %448 = vmatmul.mubr.bf16.gmra.mrb[0].mxu0 %v410
        %v449 = vpop.f32.mrb[0].mxu0
        %v450 = vadd.f32 0.0, %v449
        %v451 = vpop.f32.mrb[0].mxu0
        %v452 = vpop.f32.mrb[0].mxu0
        %v453 = vpop.f32.mrb[0].mxu0
        %454 = vdwg.mxu0
        %v455 = vmul.f32 %v312, 0.25
        %v456 = vmul.f32 %v358, 0.25
        %v457 = vmul.f32 %v404, 0.25
        %v458 = vmul.f32 %v450, 0.25
        %vm459 = vcmask 64512
        %v460 = vsel %vm459, %v455, -inf
        %461 = vmax.xlane.f32.xlu0 %v460
        %v462 = vpop.xlane.xlu0 %461
        %v463 = vsel %vm459, %v456, -inf
        %464 = vmax.xlane.f32.xlu0 %v463
        %v465 = vpop.xlane.xlu0 %464
        %v466 = vsel %vm459, %v457, -inf
        %467 = vmax.xlane.f32.xlu0 %v466
        %v468 = vpop.xlane.xlu0 %467
        %v469 = vsel %vm459, %v458, -inf
        %470 = vmax.xlane.f32.xlu0 %v469
        %v471 = vpop.xlane.xlu0 %470
        %v472 = vsub.f32 %v455, %v462
        %v473 = vsub.f32 %v456, %v465
        %v474 = vsub.f32 %v457, %v468
        %v475 = vsub.f32 %v458, %v471
        %v476 = vmul.f32 %v472, 1.442695
        %v477 = vpow.pop %v476
        %v478 = vmul.f32 %v473, 1.442695
        %v479 = vpow.pop %v478
        %v480 = vmul.f32 %v474, 1.442695
        %v481 = vpow.pop %v480
        %v482 = vmul.f32 %v475, 1.442695
        %v483 = vpow.pop %v482
        %v484 = vsel %vm459, %v477, 0.0
        %485 = vadd.xlane.f32.xlu0 %v484
        %v486 = vpop.xlane.xlu0 %485
        %v487 = vsel %vm459, %v479, 0.0
        %488 = vadd.xlane.f32.xlu0 %v487
        %v489 = vpop.xlane.xlu0 %488
        %v490 = vsel %vm459, %v481, 0.0
        %491 = vadd.xlane.f32.xlu0 %v490
        %v492 = vpop.xlane.xlu0 %491
        %v493 = vsel %vm459, %v483, 0.0
        %494 = vadd.xlane.f32.xlu0 %v493
        %v495 = vpop.xlane.xlu0 %494
        %v496 = vrcp.pop %v486
        %v497 = vmul.f32 %v477, %v496
        %v498 = vrcp.pop %v489
        %v499 = vmul.f32 %v479, %v498
        %v500 = vrcp.pop %v492
        %v501 = vmul.f32 %v481, %v500
        %v502 = vrcp.pop %v495
        %v503 = vmul.f32 %v483, %v502
        %504 = vst.msk [vmem:[%s231] sm:$0xff] %vm459, %v497
        %505 = vst.msk [vmem:[%s231 + $0x8] sm:$0xff] %vm459, %v499
        %506 = vst.msk [vmem:[%s231 + $0x10] sm:$0xff] %vm459, %v501
        %507 = vst.msk [vmem:[%s231 + $0x18] sm:$0xff] %vm459, %v503
        %v508 = vpack.c.bf16 %v497, %v497
        %v509 = vpack.c.bf16 %v499, %v499
        %v510 = vpack.c.bf16 %v501, %v501
        %v511 = vpack.c.bf16 %v503, %v503
        %v513 = vsel %vm459, %v508, 0
        %vm515 = vcmask 1043456
        %v517 = vsel %vm515, %v266, 0
        %519 = vmatprep.subr.bf16.mxu0 0
        %520 = vmatpush1.bf16.msra.mxu0 %v517
        %521 = vmatprep.subr.bf16.mxu0 0
        %522 = vmatpush1.bf16.msra.mxu0 0
        %523 = vmatprep.subr.bf16.mxu0 0
        %524 = vmatpush1.bf16.msra.mxu0 0
        %525 = vmatprep.subr.bf16.mxu0 0
        %526 = vmatpush1.bf16.msra.mxu0 0
        %527 = vmatprep.subr.bf16.mxu0 0
        %528 = vmatpush1.bf16.msra.mxu0 0
        %529 = vmatprep.subr.bf16.mxu0 0
        %530 = vmatpush1.bf16.msra.mxu0 0
        %531 = vmatprep.subr.bf16.mxu0 0
        %532 = vmatpush1.bf16.msra.mxu0 0
        %533 = vmatprep.subr.bf16.mxu0 0
        %534 = vmatpush1.bf16.msra.mxu0 0
        %535 = vmatprep.subr.bf16.mxu0 0
        %536 = vmatpush1.bf16.msra.mxu0 0
        %537 = vmatprep.subr.bf16.mxu0 0
        %538 = vmatpush1.bf16.msra.mxu0 0
        %539 = vmatprep.subr.bf16.mxu0 0
        %540 = vmatpush1.bf16.msra.mxu0 0
        %541 = vmatprep.subr.bf16.mxu0 0
        %542 = vmatpush1.bf16.msra.mxu0 0
        %543 = vmatprep.subr.bf16.mxu0 0
        %544 = vmatpush1.bf16.msra.mxu0 0
        %545 = vmatprep.subr.bf16.mxu0 0
        %546 = vmatpush1.bf16.msra.mxu0 0
        %547 = vmatprep.subr.bf16.mxu0 0
        %548 = vmatpush1.bf16.msra.mxu0 0
        %549 = vmatprep.subr.bf16.mxu0 0
        %550 = vmatpush1.bf16.msra.mxu0 0
        %551 = vmatprep.mubr.bf16.mxu0 0
        %552 = vmatmul.mubr.bf16.gmra.mrb[0].mxu0 %v513
        %v553 = vpop.f32.mrb[0].mxu0
        %v554 = vadd.f32 0.0, %v553
        %v555 = vpop.f32.mrb[0].mxu0
        %v556 = vpop.f32.mrb[0].mxu0
        %v557 = vpop.f32.mrb[0].mxu0
        %558 = vdwg.mxu0
        %v560 = vsel %vm459, %v509, 0
        %v563 = vsel %vm515, %v267, 0
        %565 = vmatprep.subr.bf16.mxu0 0
        %566 = vmatpush1.bf16.msra.mxu0 %v563
        %567 = vmatprep.subr.bf16.mxu0 0
        %568 = vmatpush1.bf16.msra.mxu0 0
        %569 = vmatprep.subr.bf16.mxu0 0
        %570 = vmatpush1.bf16.msra.mxu0 0
        %571 = vmatprep.subr.bf16.mxu0 0
        %572 = vmatpush1.bf16.msra.mxu0 0
        %573 = vmatprep.subr.bf16.mxu0 0
        %574 = vmatpush1.bf16.msra.mxu0 0
        %575 = vmatprep.subr.bf16.mxu0 0
        %576 = vmatpush1.bf16.msra.mxu0 0
        %577 = vmatprep.subr.bf16.mxu0 0
        %578 = vmatpush1.bf16.msra.mxu0 0
        %579 = vmatprep.subr.bf16.mxu0 0
        %580 = vmatpush1.bf16.msra.mxu0 0
        %581 = vmatprep.subr.bf16.mxu0 0
        %582 = vmatpush1.bf16.msra.mxu0 0
        %583 = vmatprep.subr.bf16.mxu0 0
        %584 = vmatpush1.bf16.msra.mxu0 0
        %585 = vmatprep.subr.bf16.mxu0 0
        %586 = vmatpush1.bf16.msra.mxu0 0
        %587 = vmatprep.subr.bf16.mxu0 0
        %588 = vmatpush1.bf16.msra.mxu0 0
        %589 = vmatprep.subr.bf16.mxu0 0
        %590 = vmatpush1.bf16.msra.mxu0 0
        %591 = vmatprep.subr.bf16.mxu0 0
        %592 = vmatpush1.bf16.msra.mxu0 0
        %593 = vmatprep.subr.bf16.mxu0 0
        %594 = vmatpush1.bf16.msra.mxu0 0
        %595 = vmatprep.subr.bf16.mxu0 0
        %596 = vmatpush1.bf16.msra.mxu0 0
        %597 = vmatprep.mubr.bf16.mxu0 0
        %598 = vmatmul.mubr.bf16.gmra.mrb[0].mxu0 %v560
        %v599 = vpop.f32.mrb[0].mxu0
        %v600 = vadd.f32 0.0, %v599
        %v601 = vpop.f32.mrb[0].mxu0
        %v602 = vpop.f32.mrb[0].mxu0
        %v603 = vpop.f32.mrb[0].mxu0
        %604 = vdwg.mxu0
        %v606 = vsel %vm459, %v510, 0
        %v609 = vsel %vm515, %v268, 0
        %611 = vmatprep.subr.bf16.mxu0 0
        %612 = vmatpush1.bf16.msra.mxu0 %v609
        %613 = vmatprep.subr.bf16.mxu0 0
        %614 = vmatpush1.bf16.msra.mxu0 0
        %615 = vmatprep.subr.bf16.mxu0 0
        %616 = vmatpush1.bf16.msra.mxu0 0
        %617 = vmatprep.subr.bf16.mxu0 0
        %618 = vmatpush1.bf16.msra.mxu0 0
        %619 = vmatprep.subr.bf16.mxu0 0
        %620 = vmatpush1.bf16.msra.mxu0 0
        %621 = vmatprep.subr.bf16.mxu0 0
        %622 = vmatpush1.bf16.msra.mxu0 0
        %623 = vmatprep.subr.bf16.mxu0 0
        %624 = vmatpush1.bf16.msra.mxu0 0
        %625 = vmatprep.subr.bf16.mxu0 0
        %626 = vmatpush1.bf16.msra.mxu0 0
        %627 = vmatprep.subr.bf16.mxu0 0
        %628 = vmatpush1.bf16.msra.mxu0 0
        %629 = vmatprep.subr.bf16.mxu0 0
        %630 = vmatpush1.bf16.msra.mxu0 0
        %631 = vmatprep.subr.bf16.mxu0 0
        %632 = vmatpush1.bf16.msra.mxu0 0
        %633 = vmatprep.subr.bf16.mxu0 0
        %634 = vmatpush1.bf16.msra.mxu0 0
        %635 = vmatprep.subr.bf16.mxu0 0
        %636 = vmatpush1.bf16.msra.mxu0 0
        %637 = vmatprep.subr.bf16.mxu0 0
        %638 = vmatpush1.bf16.msra.mxu0 0
        %639 = vmatprep.subr.bf16.mxu0 0
        %640 = vmatpush1.bf16.msra.mxu0 0
        %641 = vmatprep.subr.bf16.mxu0 0
        %642 = vmatpush1.bf16.msra.mxu0 0
        %643 = vmatprep.mubr.bf16.mxu0 0
        %644 = vmatmul.mubr.bf16.gmra.mrb[0].mxu0 %v606
        %v645 = vpop.f32.mrb[0].mxu0
        %v646 = vadd.f32 0.0, %v645
        %v647 = vpop.f32.mrb[0].mxu0
        %v648 = vpop.f32.mrb[0].mxu0
        %v649 = vpop.f32.mrb[0].mxu0
        %650 = vdwg.mxu0
        %v652 = vsel %vm459, %v511, 0
        %v655 = vsel %vm515, %v269, 0
        %657 = vmatprep.subr.bf16.mxu0 0
        %658 = vmatpush1.bf16.msra.mxu0 %v655
        %659 = vmatprep.subr.bf16.mxu0 0
        %660 = vmatpush1.bf16.msra.mxu0 0
        %661 = vmatprep.subr.bf16.mxu0 0
        %662 = vmatpush1.bf16.msra.mxu0 0
        %663 = vmatprep.subr.bf16.mxu0 0
        %664 = vmatpush1.bf16.msra.mxu0 0
        %665 = vmatprep.subr.bf16.mxu0 0
        %666 = vmatpush1.bf16.msra.mxu0 0
        %667 = vmatprep.subr.bf16.mxu0 0
        %668 = vmatpush1.bf16.msra.mxu0 0
        %669 = vmatprep.subr.bf16.mxu0 0
        %670 = vmatpush1.bf16.msra.mxu0 0
        %671 = vmatprep.subr.bf16.mxu0 0
        %672 = vmatpush1.bf16.msra.mxu0 0
        %673 = vmatprep.subr.bf16.mxu0 0
        %674 = vmatpush1.bf16.msra.mxu0 0
        %675 = vmatprep.subr.bf16.mxu0 0
        %676 = vmatpush1.bf16.msra.mxu0 0
        %677 = vmatprep.subr.bf16.mxu0 0
        %678 = vmatpush1.bf16.msra.mxu0 0
        %679 = vmatprep.subr.bf16.mxu0 0
        %680 = vmatpush1.bf16.msra.mxu0 0
        %681 = vmatprep.subr.bf16.mxu0 0
        %682 = vmatpush1.bf16.msra.mxu0 0
        %683 = vmatprep.subr.bf16.mxu0 0
        %684 = vmatpush1.bf16.msra.mxu0 0
        %685 = vmatprep.subr.bf16.mxu0 0
        %686 = vmatpush1.bf16.msra.mxu0 0
        %687 = vmatprep.subr.bf16.mxu0 0
        %688 = vmatpush1.bf16.msra.mxu0 0
        %689 = vmatprep.mubr.bf16.mxu0 0
        %690 = vmatmul.mubr.bf16.gmra.mrb[0].mxu0 %v652
        %v691 = vpop.f32.mrb[0].mxu0
        %v692 = vadd.f32 0.0, %v691
        %v693 = vpop.f32.mrb[0].mxu0
        %v694 = vpop.f32.mrb[0].mxu0
        %v695 = vpop.f32.mrb[0].mxu0
        %696 = vdwg.mxu0
        %v697 = vpack.c.bf16 %v554, %v554
        %v698 = vpack.c.bf16 %v600, %v600
        %v699 = vpack.c.bf16 %v646, %v646
        %v700 = vpack.c.bf16 %v692, %v692
        %vm701 = vcmask 519168
        %702 = vst.msk [vmem:[%s254] sm:$0xf] %vm701, %v697
        %703 = vst.msk [vmem:[%s254 + $0x4] sm:$0xf] %vm701, %v698
        %704 = vst.msk [vmem:[%s254 + $0x8] sm:$0xf] %vm701, %v699
        %705 = vst.msk [vmem:[%s254 + $0xc] sm:$0xf] %vm701, %v700
        %s706 = smul.u32 4, %s19
        %p707 = scmp.lt.s32.totalorder %s706, 7
        %s708 = scalar_select %p707, %s706, 7
        %s709 = smul.addr %s708, 4
        %s710 = scalar_lea.vmem %s3, %s709
        %s711 = sand.u32 %s131, 1
        %s712 = scalar_lea.sflag [#allocation3], %s711
        %s713 = sand.u32 %s131, 1
        %s714 = smul.addr %s713, 32
        %s715 = scalar_lea.vmem [#allocation2], %s714
        // Predicated region
        $region33: #{multi_head_attention.4} parent=31 // pred_check
          %p716 = pneg %p115
        $region34: #{multi_head_attention.4} parent=31 // pred_check_branch
          %718 = sbr.rel (%p716) target = $region36
        $region35: #{multi_head_attention.4} parent=31 // pred_region
          %s719 = smul.u32 4, %s19
        $region36: #{multi_head_attention.4} parent=31 // pred_fallthru
          _
        // Predicated region
        $region37: #{multi_head_attention.4} parent=31 // pred_check
          %p720 = pneg %p141
        $region38: #{multi_head_attention.4} parent=31 // pred_check_branch
          %722 = sbr.rel (%p720) target = $region40
        $region39: #{multi_head_attention.4} parent=31 // pred_region
          %s723 = smul.u32 4, %s19
          %s725 = ssub.s32 512, 512
          %726 = vsyncadd %s712, %s725
          %s727 = smul.addr %s723, 128
          %s728 = scalar_lea.hbm %s4, %s727
          %s729 = sshll.u32 %s715, 4
          %s730 = int_to_ptr.vmem [resolvable:$true] %s729
          %735 = dma.vmem_to_hbm [thread:$0]  %s730, 512, %s728, %s712, 128, 128, 8
        $region40: #{multi_head_attention.4} parent=31 // pred_fallthru
          _
      $region32: #{multi_head_attention.4} parent=5 // pred_fallthru
        _
      %p736 = scmp.le.s32.totalorder 2, %s14
      // Predicated region
      $region41: #{multi_head_attention.4} parent=5 // pred_check
        %p737 = pneg %p736
      $region42: #{multi_head_attention.4} parent=5 // pred_check_branch
        %739 = sbr.rel (%p737) target = $region44
      $region43: #{multi_head_attention.4} parent=5 // pred_region
        %s740 = ssub.s32 %s14, 2
        // Predicated region
        $region45: #{multi_head_attention.4} parent=43 // pred_check
          %p741 = pneg %p121
        $region46: #{multi_head_attention.4} parent=43 // pred_check_branch
          %743 = sbr.rel (%p741) target = $region48
        $region47: #{multi_head_attention.4} parent=43 // pred_region
          %s744 = smul.u32 4, %s20
          %p745 = scmp.lt.s32.totalorder %s744, 7
          %s746 = scalar_select %p745, %s744, 7
          %s747 = smul.addr %s746, 4
          %s748 = scalar_lea.vmem %s3, %s747
        $region48: #{multi_head_attention.4} parent=43 // pred_fallthru
          _
        // Predicated region
        $region49: #{multi_head_attention.4} parent=43 // pred_check
          %p749 = pneg %p147
        $region50: #{multi_head_attention.4} parent=43 // pred_check_branch
          %751 = sbr.rel (%p749) target = $region52
        $region51: #{multi_head_attention.4} parent=43 // pred_region
          %s752 = sand.u32 %s132, 1
          %s753 = scalar_lea.sflag [#allocation3], %s752
          %s754 = sand.u32 %s132, 1
          %s755 = smul.addr %s754, 32
          %s756 = scalar_lea.vmem [#allocation2], %s755
          %757 = dma.done %s753, 512
        $region52: #{multi_head_attention.4} parent=43 // pred_fallthru
          _
      $region44: #{multi_head_attention.4} parent=5 // pred_fallthru
        _
    $region6: #{multi_head_attention.4} parent=1 // loop_footer
      %s18 = sadd.s32 1, %s14
    $region7: #{multi_head_attention.4} parent=1 // loop_footer_branch
      %13 = sbr.rel target = $region3
    $region8: #{multi_head_attention.4} parent=1 // loop_exit
      _
    %758 = vsyncpa [#allocation3], 1
    %s759 = scalar_lea.sflag [#allocation3], 1
    %760 = vsyncpa %s759, 1

// kernel: multi_head_attention.5
$region0: #{multi_head_attention.5}
  #allocation0 [shape = 'u32[]', space=smem, size = 0x4, offset = 0x4, fixed_abs, tag = 'smem constant byte address 0x4 - core index']
  #allocation1 [shape = 'u32[144,128]{1,0:T(1,128)}', space=vmem, size = 0x12000, scoped, tag = 'internal scratch']
  %s0 = inlined_call_operand.vmem [shape: bf16[16,256], index: 0, kind: input, shape index: {}]
  %s1 = inlined_call_operand.vmem [shape: f32[16,256], index: 1, kind: input, shape index: {}]
  %s2 = inlined_call_operand.vmem [shape: bf16[256,256], index: 2, kind: input, shape index: {}]
  %s3 = inlined_call_operand.vmem [shape: f32[1,256], index: 3, kind: input, shape index: {}]
  %s4 = inlined_call_operand.vmem [shape: f32[1,256], index: 4, kind: input, shape index: {}]
  %s5 = inlined_call_operand.vmem [shape: f32[1,256], index: 5, kind: input, shape index: {}]
  %s6 = inlined_call_operand.hbm [shape: f32[16,256], index: 6, kind: output, shape index: {}]
  %s7 = sld [smem:[#allocation0]]
  $region34: #{multi_head_attention.5} parent=0
    _
  %s9 = ssub.s32 1, %s7
  %s10 = scalar_select 0, %s9, %s7
  $region1: #{multi_head_attention.5} parent=0
    #allocation2 [shape = 'u8[16384]{0}', space=vmem, size = 0x4000, scoped, tag = 'output window, operand 0, single buffered']
    #allocation3 [shape = 's32[1]{0}', space=sflag, size = 0x4, scoped, tag = 'scoped memory for multi_head_attention.5']
    %11 = vsyncpa [#allocation3], 0
    // Predicated region
    $region2: #{multi_head_attention.5} parent=1 // pred_check
      _
    $region3: #{multi_head_attention.5} parent=1 // pred_check_branch
      %13 = sbr.rel (0) target = $region5
    $region4: #{multi_head_attention.5} parent=1 // pred_region
      _
    $region5: #{multi_head_attention.5} parent=1 // pred_fallthru
      _
    // Predicated region
    $region6: #{multi_head_attention.5} parent=1 // pred_check
      _
    $region7: #{multi_head_attention.5} parent=1 // pred_check_branch
      %15 = sbr.rel (0) target = $region9
    $region8: #{multi_head_attention.5} parent=1 // pred_region
      _
    $region9: #{multi_head_attention.5} parent=1 // pred_fallthru
      _
    // Predicated region
    $region10: #{multi_head_attention.5} parent=1 // pred_check
      _
    $region11: #{multi_head_attention.5} parent=1 // pred_check_branch
      %17 = sbr.rel (0) target = $region13
    $region12: #{multi_head_attention.5} parent=1 // pred_region
      _
    $region13: #{multi_head_attention.5} parent=1 // pred_fallthru
      _
    // Predicated region
    $region14: #{multi_head_attention.5} parent=1 // pred_check
      _
    $region15: #{multi_head_attention.5} parent=1 // pred_check_branch
      %19 = sbr.rel (0) target = $region17
    $region16: #{multi_head_attention.5} parent=1 // pred_region
      _
    $region17: #{multi_head_attention.5} parent=1 // pred_fallthru
      _
    // Predicated region
    $region18: #{multi_head_attention.5} parent=1 // pred_check
      _
    $region19: #{multi_head_attention.5} parent=1 // pred_check_branch
      %21 = sbr.rel (0) target = $region21
    $region20: #{multi_head_attention.5} parent=1 // pred_region
      _
    $region21: #{multi_head_attention.5} parent=1 // pred_fallthru
      _
    // Predicated region
    $region22: #{multi_head_attention.5} parent=1 // pred_check
      _
    $region23: #{multi_head_attention.5} parent=1 // pred_check_branch
      %23 = sbr.rel (0) target = $region25
    $region24: #{multi_head_attention.5} parent=1 // pred_region
      _
    $region25: #{multi_head_attention.5} parent=1 // pred_fallthru
      _
    %v24 = vld [vmem:[%s0] sm:$0xff]
    %v25 = vld [vmem:[%s0 + $0x8] sm:$0xff]
    %v26 = vld [vmem:[%s2] sm:$0xff]
    %v27 = vld [vmem:[%s2 + $0x8] sm:$0xff]
    %v28 = vld [vmem:[%s2 + $0x10] sm:$0xff]
    %v29 = vld [vmem:[%s2 + $0x18] sm:$0xff]
    %v30 = vld [vmem:[%s2 + $0x20] sm:$0xff]
    %v31 = vld [vmem:[%s2 + $0x28] sm:$0xff]
    %v32 = vld [vmem:[%s2 + $0x30] sm:$0xff]
    %v33 = vld [vmem:[%s2 + $0x38] sm:$0xff]
    %v34 = vld [vmem:[%s2 + $0x40] sm:$0xff]
    %v35 = vld [vmem:[%s2 + $0x48] sm:$0xff]
    %v36 = vld [vmem:[%s2 + $0x50] sm:$0xff]
    %v37 = vld [vmem:[%s2 + $0x58] sm:$0xff]
    %v38 = vld [vmem:[%s2 + $0x60] sm:$0xff]
    %v39 = vld [vmem:[%s2 + $0x68] sm:$0xff]
    %v40 = vld [vmem:[%s2 + $0x70] sm:$0xff]
    %v41 = vld [vmem:[%s2 + $0x78] sm:$0xff]
    %v42 = vld [vmem:[%s2 + $0x80] sm:$0xff]
    %v43 = vld [vmem:[%s2 + $0x88] sm:$0xff]
    %v44 = vld [vmem:[%s2 + $0x90] sm:$0xff]
    %v45 = vld [vmem:[%s2 + $0x98] sm:$0xff]
    %v46 = vld [vmem:[%s2 + $0xa0] sm:$0xff]
    %v47 = vld [vmem:[%s2 + $0xa8] sm:$0xff]
    %v48 = vld [vmem:[%s2 + $0xb0] sm:$0xff]
    %v49 = vld [vmem:[%s2 + $0xb8] sm:$0xff]
    %v50 = vld [vmem:[%s2 + $0xc0] sm:$0xff]
    %v51 = vld [vmem:[%s2 + $0xc8] sm:$0xff]
    %v52 = vld [vmem:[%s2 + $0xd0] sm:$0xff]
    %v53 = vld [vmem:[%s2 + $0xd8] sm:$0xff]
    %v54 = vld [vmem:[%s2 + $0xe0] sm:$0xff]
    %v55 = vld [vmem:[%s2 + $0xe8] sm:$0xff]
    %v56 = vld [vmem:[%s2 + $0xf0] sm:$0xff]
    %v57 = vld [vmem:[%s2 + $0xf8] sm:$0xff]
    %v58 = vld [vmem:[%s1] sm:$0xff]
    %v59 = vld [vmem:[%s1 + $0x8] sm:$0xff]
    %v60 = vld [vmem:[%s1 + $0x10] sm:$0xff]
    %v61 = vld [vmem:[%s1 + $0x18] sm:$0xff]
    %v62 = vld [vmem:[%s3] sm:$0x3]
    %v64 = vlaneseq
    %v65 = vshrl.u32 %v64, 7
    %v66 = vsub.s32 0, %v65
    %v67 = vrot.slane %v62, %v66
    %v68 = vlaneseq
    %v69 = vshrl.u32 %v68, 7
    %v70 = vsub.s32 1, %v69
    %v71 = vrot.slane %v62, %v70
    %v76 = vunpack.c.l.b16 %v24
    %v77 = vunpack.c.h.b16 %v24
    %v78 = vunpack.c.l.b16 %v25
    %v79 = vunpack.c.h.b16 %v25
    %v80 = vpack.c.b16 %v78, %v76
    %v81 = vpack.c.b16 %v79, %v77
    %v116 = vunpack.c.l.b16 %v26
    %v117 = vunpack.c.h.b16 %v26
    %v118 = vunpack.c.l.b16 %v27
    %v119 = vunpack.c.h.b16 %v27
    %v120 = vunpack.c.l.b16 %v28
    %v121 = vunpack.c.h.b16 %v28
    %v122 = vunpack.c.l.b16 %v29
    %v123 = vunpack.c.h.b16 %v29
    %v124 = vunpack.c.l.b16 %v30
    %v125 = vunpack.c.h.b16 %v30
    %v126 = vunpack.c.l.b16 %v31
    %v127 = vunpack.c.h.b16 %v31
    %v128 = vunpack.c.l.b16 %v32
    %v129 = vunpack.c.h.b16 %v32
    %v130 = vunpack.c.l.b16 %v33
    %v131 = vunpack.c.h.b16 %v33
    %v132 = vunpack.c.l.b16 %v34
    %v133 = vunpack.c.h.b16 %v34
    %v134 = vunpack.c.l.b16 %v35
    %v135 = vunpack.c.h.b16 %v35
    %v136 = vunpack.c.l.b16 %v36
    %v137 = vunpack.c.h.b16 %v36
    %v138 = vunpack.c.l.b16 %v37
    %v139 = vunpack.c.h.b16 %v37
    %v140 = vunpack.c.l.b16 %v38
    %v141 = vunpack.c.h.b16 %v38
    %v142 = vunpack.c.l.b16 %v39
    %v143 = vunpack.c.h.b16 %v39
    %v144 = vunpack.c.l.b16 %v40
    %v145 = vunpack.c.h.b16 %v40
    %v146 = vunpack.c.l.b16 %v41
    %v147 = vunpack.c.h.b16 %v41
    %v148 = vunpack.c.l.b16 %v42
    %v149 = vunpack.c.h.b16 %v42
    %v150 = vunpack.c.l.b16 %v43
    %v151 = vunpack.c.h.b16 %v43
    %v152 = vunpack.c.l.b16 %v44
    %v153 = vunpack.c.h.b16 %v44
    %v154 = vunpack.c.l.b16 %v45
    %v155 = vunpack.c.h.b16 %v45
    %v156 = vunpack.c.l.b16 %v46
    %v157 = vunpack.c.h.b16 %v46
    %v158 = vunpack.c.l.b16 %v47
    %v159 = vunpack.c.h.b16 %v47
    %v160 = vunpack.c.l.b16 %v48
    %v161 = vunpack.c.h.b16 %v48
    %v162 = vunpack.c.l.b16 %v49
    %v163 = vunpack.c.h.b16 %v49
    %v164 = vunpack.c.l.b16 %v50
    %v165 = vunpack.c.h.b16 %v50
    %v166 = vunpack.c.l.b16 %v51
    %v167 = vunpack.c.h.b16 %v51
    %v168 = vunpack.c.l.b16 %v52
    %v169 = vunpack.c.h.b16 %v52
    %v170 = vunpack.c.l.b16 %v53
    %v171 = vunpack.c.h.b16 %v53
    %v172 = vunpack.c.l.b16 %v54
    %v173 = vunpack.c.h.b16 %v54
    %v174 = vunpack.c.l.b16 %v55
    %v175 = vunpack.c.h.b16 %v55
    %v176 = vunpack.c.l.b16 %v56
    %v177 = vunpack.c.h.b16 %v56
    %v178 = vunpack.c.l.b16 %v57
    %v179 = vunpack.c.h.b16 %v57
    %v180 = vpack.c.b16 %v118, %v116
    %v181 = vpack.c.b16 %v119, %v117
    %v182 = vpack.c.b16 %v122, %v120
    %v183 = vpack.c.b16 %v123, %v121
    %v184 = vpack.c.b16 %v126, %v124
    %v185 = vpack.c.b16 %v127, %v125
    %v186 = vpack.c.b16 %v130, %v128
    %v187 = vpack.c.b16 %v131, %v129
    %v188 = vpack.c.b16 %v134, %v132
    %v189 = vpack.c.b16 %v135, %v133
    %v190 = vpack.c.b16 %v138, %v136
    %v191 = vpack.c.b16 %v139, %v137
    %v192 = vpack.c.b16 %v142, %v140
    %v193 = vpack.c.b16 %v143, %v141
    %v194 = vpack.c.b16 %v146, %v144
    %v195 = vpack.c.b16 %v147, %v145
    %v196 = vpack.c.b16 %v150, %v148
    %v197 = vpack.c.b16 %v151, %v149
    %v198 = vpack.c.b16 %v154, %v152
    %v199 = vpack.c.b16 %v155, %v153
    %v200 = vpack.c.b16 %v158, %v156
    %v201 = vpack.c.b16 %v159, %v157
    %v202 = vpack.c.b16 %v162, %v160
    %v203 = vpack.c.b16 %v163, %v161
    %v204 = vpack.c.b16 %v166, %v164
    %v205 = vpack.c.b16 %v167, %v165
    %v206 = vpack.c.b16 %v170, %v168
    %v207 = vpack.c.b16 %v171, %v169
    %v208 = vpack.c.b16 %v174, %v172
    %v209 = vpack.c.b16 %v175, %v173
    %v210 = vpack.c.b16 %v178, %v176
    %v211 = vpack.c.b16 %v179, %v177
    %244 = vmatprep.subr.bf16.mxu0 %v181
    %245 = vmatpush1.bf16.msra.mxu0 %v180
    %246 = vmatprep.subr.bf16.mxu0 %v183
    %247 = vmatpush1.bf16.msra.mxu0 %v182
    %248 = vmatprep.subr.bf16.mxu0 %v185
    %249 = vmatpush1.bf16.msra.mxu0 %v184
    %250 = vmatprep.subr.bf16.mxu0 %v187
    %251 = vmatpush1.bf16.msra.mxu0 %v186
    %252 = vmatprep.subr.bf16.mxu0 %v189
    %253 = vmatpush1.bf16.msra.mxu0 %v188
    %254 = vmatprep.subr.bf16.mxu0 %v191
    %255 = vmatpush1.bf16.msra.mxu0 %v190
    %256 = vmatprep.subr.bf16.mxu0 %v193
    %257 = vmatpush1.bf16.msra.mxu0 %v192
    %258 = vmatprep.subr.bf16.mxu0 %v195
    %259 = vmatpush1.bf16.msra.mxu0 %v194
    %260 = vmatprep.subr.bf16.mxu0 %v197
    %261 = vmatpush1.bf16.msra.mxu0 %v196
    %262 = vmatprep.subr.bf16.mxu0 %v199
    %263 = vmatpush1.bf16.msra.mxu0 %v198
    %264 = vmatprep.subr.bf16.mxu0 %v201
    %265 = vmatpush1.bf16.msra.mxu0 %v200
    %266 = vmatprep.subr.bf16.mxu0 %v203
    %267 = vmatpush1.bf16.msra.mxu0 %v202
    %268 = vmatprep.subr.bf16.mxu0 %v205
    %269 = vmatpush1.bf16.msra.mxu0 %v204
    %270 = vmatprep.subr.bf16.mxu0 %v207
    %271 = vmatpush1.bf16.msra.mxu0 %v206
    %272 = vmatprep.subr.bf16.mxu0 %v209
    %273 = vmatpush1.bf16.msra.mxu0 %v208
    %274 = vmatprep.subr.bf16.mxu0 %v211
    %275 = vmatpush1.bf16.msra.mxu0 %v210
    %276 = vmatprep.mubr.bf16.mxu0 %v81
    %277 = vmatmul.mubr.bf16.gmra.mrb[0].mxu0 %v80
    %v278 = vpop.f32.mrb[0].mxu0
    %v279 = vadd.f32 %v67, %v278
    %v280 = vpop.f32.mrb[0].mxu0
    %v281 = vadd.f32 %v71, %v280
    %v282 = vpop.f32.mrb[0].mxu0
    %v283 = vadd.f32 %v67, %v282
    %v284 = vpop.f32.mrb[0].mxu0
    %v285 = vadd.f32 %v71, %v284
    %286 = vdwg.mxu0
    %v287 = vadd.f32 %v58, %v279
    %v288 = vadd.f32 %v59, %v281
    %v289 = vadd.f32 %v60, %v283
    %v290 = vadd.f32 %v61, %v285
    %v291 = vadd.f32 %v287, %v288
    %292 = vadd.xlane.f32.xlu0 %v291
    %v293 = vpop.xlane.xlu0 %292
    %v294 = vadd.f32 %v289, %v290
    %295 = vadd.xlane.f32.xlu0 %v294
    %v296 = vpop.xlane.xlu0 %295
    %v297 = vrcp.pop 256.0
    %v298 = vmul.f32 %v293, %v297
    %v299 = vmul.f32 %v296, %v297
    %v300 = vsub.f32 %v287, %v298
    %v301 = vsub.f32 %v288, %v298
    %v302 = vsub.f32 %v289, %v299
    %v303 = vsub.f32 %v290, %v299
    %v304 = vmul.f32 %v300, %v300
    %v305 = vmul.f32 %v301, %v301
    %v306 = vmul.f32 %v302, %v302
    %v307 = vmul.f32 %v303, %v303
    %v308 = vadd.f32 %v304, %v305
    %309 = vadd.xlane.f32.xlu0 %v308
    %v310 = vpop.xlane.xlu0 %309
    %v311 = vadd.f32 %v306, %v307
    %312 = vadd.xlane.f32.xlu0 %v311
    %v313 = vpop.xlane.xlu0 %312
    %v314 = vmul.f32 %v310, %v297
    %v315 = vmul.f32 %v313, %v297
    %v316 = vld [vmem:[%s4] sm:$0x3]
    %v317 = vadd.f32 %v314, 1e-05
    %v318 = vadd.f32 %v315, 1e-05
    %v319 = vrsqrt.pop %v317
    %v320 = vrsqrt.pop %v318
    %v322 = vlaneseq
    %v323 = vshrl.u32 %v322, 7
    %v324 = vsub.s32 0, %v323
    %v325 = vrot.slane %v316, %v324
    %v326 = vlaneseq
    %v327 = vshrl.u32 %v326, 7
    %v328 = vsub.s32 1, %v327
    %v329 = vrot.slane %v316, %v328
    %v332 = vmul.f32 %v325, %v319
    %v333 = vmul.f32 %v329, %v319
    %v334 = vmul.f32 %v325, %v320
    %v335 = vmul.f32 %v329, %v320
    %v336 = vmul.f32 %v300, %v332
    %v337 = vmul.f32 %v301, %v333
    %v338 = vmul.f32 %v302, %v334
    %v339 = vmul.f32 %v303, %v335
    %v340 = vld [vmem:[%s5] sm:$0x3]
    %v342 = vlaneseq
    %v343 = vshrl.u32 %v342, 7
    %v344 = vsub.s32 0, %v343
    %v345 = vrot.slane %v340, %v344
    %v346 = vlaneseq
    %v347 = vshrl.u32 %v346, 7
    %v348 = vsub.s32 1, %v347
    %v349 = vrot.slane %v340, %v348
    %v352 = vadd.f32 %v336, %v345
    %v353 = vadd.f32 %v337, %v349
    %v354 = vadd.f32 %v338, %v345
    %v355 = vadd.f32 %v339, %v349
    %356 = vst [vmem:[#allocation2] sm:$0xff] %v352
    %357 = vst [vmem:[#allocation2 + $0x8] sm:$0xff] %v353
    %358 = vst [vmem:[#allocation2 + $0x10] sm:$0xff] %v354
    %359 = vst [vmem:[#allocation2 + $0x18] sm:$0xff] %v355
    // Predicated region
    $region26: #{multi_head_attention.5} parent=1 // pred_check
      _
    $region27: #{multi_head_attention.5} parent=1 // pred_check_branch
      %361 = sbr.rel (0) target = $region29
    $region28: #{multi_head_attention.5} parent=1 // pred_region
      %s363 = ssub.s32 512, 512
      %364 = vsyncadd [#allocation3], %s363
      %s365 = sshll.u32 [#allocation2], 4
      %s366 = int_to_ptr.vmem [resolvable:$true] %s365
      %371 = dma.vmem_to_hbm [thread:$0]  %s366, 512, %s6, [#allocation3], 256, 256, 16
    $region29: #{multi_head_attention.5} parent=1 // pred_fallthru
      _
    // Predicated region
    $region30: #{multi_head_attention.5} parent=1 // pred_check
      _
    $region31: #{multi_head_attention.5} parent=1 // pred_check_branch
      %373 = sbr.rel (0) target = $region33
    $region32: #{multi_head_attention.5} parent=1 // pred_region
      %374 = dma.done [#allocation3], 512
    $region33: #{multi_head_attention.5} parent=1 // pred_fallthru
      _
    %375 = vsyncpa [#allocation3], 1

// kernel: multi_head_attention.3
$region0: #{multi_head_attention.3}
  #allocation0 [shape = 'u32[]', space=smem, size = 0x4, offset = 0x4, fixed_abs, tag = 'smem constant byte address 0x4 - core index']
  #allocation1 [shape = 'u32[144,128]{1,0:T(1,128)}', space=vmem, size = 0x12000, scoped, tag = 'internal scratch']
  %s0 = inlined_call_operand.vmem [shape: bf16[16,256], index: 0, kind: input, shape index: {}]
  %s1 = inlined_call_operand.vmem [shape: bf16[16,256], index: 1, kind: input, shape index: {}]
  %s2 = inlined_call_operand.vmem [shape: bf16[16,256], index: 2, kind: input, shape index: {}]
  %s3 = inlined_call_operand.vmem [shape: bf16[256,256], index: 3, kind: input, shape index: {}]
  %s4 = inlined_call_operand.vmem [shape: f32[1,256], index: 4, kind: input, shape index: {}]
  %s5 = inlined_call_operand.vmem [shape: bf16[256,256], index: 5, kind: input, shape index: {}]
  %s6 = inlined_call_operand.vmem [shape: f32[1,256], index: 6, kind: input, shape index: {}]
  %s7 = inlined_call_operand.vmem [shape: bf16[256,256], index: 7, kind: input, shape index: {}]
  %s8 = inlined_call_operand.vmem [shape: f32[1,256], index: 8, kind: input, shape index: {}]
  %s9 = inlined_call_operand.vmem [shape: bf16[16,256], index: 9, kind: output, shape index: {0}]
  %s10 = inlined_call_operand.vmem [shape: bf16[16,256], index: 10, kind: output, shape index: {1}]
  %s11 = inlined_call_operand.vmem [shape: bf16[16,256], index: 11, kind: output, shape index: {2}]
  %12 = xla_tuple %s9, %s10, %s11
  %s13 = sld [smem:[#allocation0]]
  $region62: #{multi_head_attention.3} parent=0
    _
  %s15 = ssub.s32 1, %s13
  %s16 = scalar_select 0, %s15, %s13
  // Predicated region
  $region2: #{multi_head_attention.3} parent=0 // pred_check
    _
  $region3: #{multi_head_attention.3} parent=0 // pred_check_branch
    %18 = sbr.rel (0) target = $region5
  $region4: #{multi_head_attention.3} parent=0 // pred_region
    _
  $region5: #{multi_head_attention.3} parent=0 // pred_fallthru
    _
  // Predicated region
  $region6: #{multi_head_attention.3} parent=0 // pred_check
    _
  $region7: #{multi_head_attention.3} parent=0 // pred_check_branch
    %20 = sbr.rel (0) target = $region9
  $region8: #{multi_head_attention.3} parent=0 // pred_region
    _
  $region9: #{multi_head_attention.3} parent=0 // pred_fallthru
    _
  // Predicated region
  $region10: #{multi_head_attention.3} parent=0 // pred_check
    _
  $region11: #{multi_head_attention.3} parent=0 // pred_check_branch
    %22 = sbr.rel (0) target = $region13
  $region12: #{multi_head_attention.3} parent=0 // pred_region
    _
  $region13: #{multi_head_attention.3} parent=0 // pred_fallthru
    _
  // Predicated region
  $region14: #{multi_head_attention.3} parent=0 // pred_check
    _
  $region15: #{multi_head_attention.3} parent=0 // pred_check_branch
    %24 = sbr.rel (0) target = $region17
  $region16: #{multi_head_attention.3} parent=0 // pred_region
    _
  $region17: #{multi_head_attention.3} parent=0 // pred_fallthru
    _
  // Predicated region
  $region18: #{multi_head_attention.3} parent=0 // pred_check
    _
  $region19: #{multi_head_attention.3} parent=0 // pred_check_branch
    %26 = sbr.rel (0) target = $region21
  $region20: #{multi_head_attention.3} parent=0 // pred_region
    _
  $region21: #{multi_head_attention.3} parent=0 // pred_fallthru
    _
  // Predicated region
  $region22: #{multi_head_attention.3} parent=0 // pred_check
    _
  $region23: #{multi_head_attention.3} parent=0 // pred_check_branch
    %28 = sbr.rel (0) target = $region25
  $region24: #{multi_head_attention.3} parent=0 // pred_region
    _
  $region25: #{multi_head_attention.3} parent=0 // pred_fallthru
    _
  // Predicated region
  $region26: #{multi_head_attention.3} parent=0 // pred_check
    _
  $region27: #{multi_head_attention.3} parent=0 // pred_check_branch
    %30 = sbr.rel (0) target = $region29
  $region28: #{multi_head_attention.3} parent=0 // pred_region
    _
  $region29: #{multi_head_attention.3} parent=0 // pred_fallthru
    _
  // Predicated region
  $region30: #{multi_head_attention.3} parent=0 // pred_check
    _
  $region31: #{multi_head_attention.3} parent=0 // pred_check_branch
    %32 = sbr.rel (0) target = $region33
  $region32: #{multi_head_attention.3} parent=0 // pred_region
    _
  $region33: #{multi_head_attention.3} parent=0 // pred_fallthru
    _
  // Predicated region
  $region34: #{multi_head_attention.3} parent=0 // pred_check
    _
  $region35: #{multi_head_attention.3} parent=0 // pred_check_branch
    %34 = sbr.rel (0) target = $region37
  $region36: #{multi_head_attention.3} parent=0 // pred_region
    _
  $region37: #{multi_head_attention.3} parent=0 // pred_fallthru
    _
  %v35 = vld [vmem:[%s0] sm:$0xff]
  %v36 = vld [vmem:[%s0 + $0x8] sm:$0xff]
  %v37 = vld [vmem:[%s3] sm:$0xff]
  %v38 = vld [vmem:[%s3 + $0x8] sm:$0xff]
  %v39 = vld [vmem:[%s3 + $0x10] sm:$0xff]
  %v40 = vld [vmem:[%s3 + $0x18] sm:$0xff]
  %v41 = vld [vmem:[%s3 + $0x20] sm:$0xff]
  %v42 = vld [vmem:[%s3 + $0x28] sm:$0xff]
  %v43 = vld [vmem:[%s3 + $0x30] sm:$0xff]
  %v44 = vld [vmem:[%s3 + $0x38] sm:$0xff]
  %v45 = vld [vmem:[%s3 + $0x40] sm:$0xff]
  %v46 = vld [vmem:[%s3 + $0x48] sm:$0xff]
  %v47 = vld [vmem:[%s3 + $0x50] sm:$0xff]
  %v48 = vld [vmem:[%s3 + $0x58] sm:$0xff]
  %v49 = vld [vmem:[%s3 + $0x60] sm:$0xff]
  %v50 = vld [vmem:[%s3 + $0x68] sm:$0xff]
  %v51 = vld [vmem:[%s3 + $0x70] sm:$0xff]
  %v52 = vld [vmem:[%s3 + $0x78] sm:$0xff]
  %v53 = vld [vmem:[%s3 + $0x80] sm:$0xff]
  %v54 = vld [vmem:[%s3 + $0x88] sm:$0xff]
  %v55 = vld [vmem:[%s3 + $0x90] sm:$0xff]
  %v56 = vld [vmem:[%s3 + $0x98] sm:$0xff]
  %v57 = vld [vmem:[%s3 + $0xa0] sm:$0xff]
  %v58 = vld [vmem:[%s3 + $0xa8] sm:$0xff]
  %v59 = vld [vmem:[%s3 + $0xb0] sm:$0xff]
  %v60 = vld [vmem:[%s3 + $0xb8] sm:$0xff]
  %v61 = vld [vmem:[%s3 + $0xc0] sm:$0xff]
  %v62 = vld [vmem:[%s3 + $0xc8] sm:$0xff]
  %v63 = vld [vmem:[%s3 + $0xd0] sm:$0xff]
  %v64 = vld [vmem:[%s3 + $0xd8] sm:$0xff]
  %v65 = vld [vmem:[%s3 + $0xe0] sm:$0xff]
  %v66 = vld [vmem:[%s3 + $0xe8] sm:$0xff]
  %v67 = vld [vmem:[%s3 + $0xf0] sm:$0xff]
  %v68 = vld [vmem:[%s3 + $0xf8] sm:$0xff]
  %v69 = vld [vmem:[%s4] sm:$0x3]
  %v71 = vlaneseq
  %v72 = vshrl.u32 %v71, 7
  %v73 = vsub.s32 0, %v72
  %v74 = vrot.slane %v69, %v73
  %v75 = vlaneseq
  %v76 = vshrl.u32 %v75, 7
  %v77 = vsub.s32 1, %v76
  %v78 = vrot.slane %v69, %v77
  %v83 = vunpack.c.l.b16 %v35
  %v84 = vunpack.c.h.b16 %v35
  %v85 = vunpack.c.l.b16 %v36
  %v86 = vunpack.c.h.b16 %v36
  %v87 = vpack.c.b16 %v85, %v83
  %v88 = vpack.c.b16 %v86, %v84
  %v123 = vunpack.c.l.b16 %v37
  %v124 = vunpack.c.h.b16 %v37
  %v125 = vunpack.c.l.b16 %v38
  %v126 = vunpack.c.h.b16 %v38
  %v127 = vunpack.c.l.b16 %v39
  %v128 = vunpack.c.h.b16 %v39
  %v129 = vunpack.c.l.b16 %v40
  %v130 = vunpack.c.h.b16 %v40
  %v131 = vunpack.c.l.b16 %v41
  %v132 = vunpack.c.h.b16 %v41
  %v133 = vunpack.c.l.b16 %v42
  %v134 = vunpack.c.h.b16 %v42
  %v135 = vunpack.c.l.b16 %v43
  %v136 = vunpack.c.h.b16 %v43
  %v137 = vunpack.c.l.b16 %v44
  %v138 = vunpack.c.h.b16 %v44
  %v139 = vunpack.c.l.b16 %v45
  %v140 = vunpack.c.h.b16 %v45
  %v141 = vunpack.c.l.b16 %v46
  %v142 = vunpack.c.h.b16 %v46
  %v143 = vunpack.c.l.b16 %v47
  %v144 = vunpack.c.h.b16 %v47
  %v145 = vunpack.c.l.b16 %v48
  %v146 = vunpack.c.h.b16 %v48
  %v147 = vunpack.c.l.b16 %v49
  %v148 = vunpack.c.h.b16 %v49
  %v149 = vunpack.c.l.b16 %v50
  %v150 = vunpack.c.h.b16 %v50
  %v151 = vunpack.c.l.b16 %v51
  %v152 = vunpack.c.h.b16 %v51
  %v153 = vunpack.c.l.b16 %v52
  %v154 = vunpack.c.h.b16 %v52
  %v155 = vunpack.c.l.b16 %v53
  %v156 = vunpack.c.h.b16 %v53
  %v157 = vunpack.c.l.b16 %v54
  %v158 = vunpack.c.h.b16 %v54
  %v159 = vunpack.c.l.b16 %v55
  %v160 = vunpack.c.h.b16 %v55
  %v161 = vunpack.c.l.b16 %v56
  %v162 = vunpack.c.h.b16 %v56
  %v163 = vunpack.c.l.b16 %v57
  %v164 = vunpack.c.h.b16 %v57
  %v165 = vunpack.c.l.b16 %v58
  %v166 = vunpack.c.h.b16 %v58
  %v167 = vunpack.c.l.b16 %v59
  %v168 = vunpack.c.h.b16 %v59
  %v169 = vunpack.c.l.b16 %v60
  %v170 = vunpack.c.h.b16 %v60
  %v171 = vunpack.c.l.b16 %v61
  %v172 = vunpack.c.h.b16 %v61
  %v173 = vunpack.c.l.b16 %v62
  %v174 = vunpack.c.h.b16 %v62
  %v175 = vunpack.c.l.b16 %v63
  %v176 = vunpack.c.h.b16 %v63
  %v177 = vunpack.c.l.b16 %v64
  %v178 = vunpack.c.h.b16 %v64
  %v179 = vunpack.c.l.b16 %v65
  %v180 = vunpack.c.h.b16 %v65
  %v181 = vunpack.c.l.b16 %v66
  %v182 = vunpack.c.h.b16 %v66
  %v183 = vunpack.c.l.b16 %v67
  %v184 = vunpack.c.h.b16 %v67
  %v185 = vunpack.c.l.b16 %v68
  %v186 = vunpack.c.h.b16 %v68
  %v187 = vpack.c.b16 %v125, %v123
  %v188 = vpack.c.b16 %v126, %v124
  %v189 = vpack.c.b16 %v129, %v127
  %v190 = vpack.c.b16 %v130, %v128
  %v191 = vpack.c.b16 %v133, %v131
  %v192 = vpack.c.b16 %v134, %v132
  %v193 = vpack.c.b16 %v137, %v135
  %v194 = vpack.c.b16 %v138, %v136
  %v195 = vpack.c.b16 %v141, %v139
  %v196 = vpack.c.b16 %v142, %v140
  %v197 = vpack.c.b16 %v145, %v143
  %v198 = vpack.c.b16 %v146, %v144
  %v199 = vpack.c.b16 %v149, %v147
  %v200 = vpack.c.b16 %v150, %v148
  %v201 = vpack.c.b16 %v153, %v151
  %v202 = vpack.c.b16 %v154, %v152
  %v203 = vpack.c.b16 %v157, %v155
  %v204 = vpack.c.b16 %v158, %v156
  %v205 = vpack.c.b16 %v161, %v159
  %v206 = vpack.c.b16 %v162, %v160
  %v207 = vpack.c.b16 %v165, %v163
  %v208 = vpack.c.b16 %v166, %v164
  %v209 = vpack.c.b16 %v169, %v167
  %v210 = vpack.c.b16 %v170, %v168
  %v211 = vpack.c.b16 %v173, %v171
  %v212 = vpack.c.b16 %v174, %v172
  %v213 = vpack.c.b16 %v177, %v175
  %v214 = vpack.c.b16 %v178, %v176
  %v215 = vpack.c.b16 %v181, %v179
  %v216 = vpack.c.b16 %v182, %v180
  %v217 = vpack.c.b16 %v185, %v183
  %v218 = vpack.c.b16 %v186, %v184
  %251 = vmatprep.subr.bf16.mxu0 %v188
  %252 = vmatpush1.bf16.msra.mxu0 %v187
  %253 = vmatprep.subr.bf16.mxu0 %v190
  %254 = vmatpush1.bf16.msra.mxu0 %v189
  %255 = vmatprep.subr.bf16.mxu0 %v192
  %256 = vmatpush1.bf16.msra.mxu0 %v191
  %257 = vmatprep.subr.bf16.mxu0 %v194
  %258 = vmatpush1.bf16.msra.mxu0 %v193
  %259 = vmatprep.subr.bf16.mxu0 %v196
  %260 = vmatpush1.bf16.msra.mxu0 %v195
  %261 = vmatprep.subr.bf16.mxu0 %v198
  %262 = vmatpush1.bf16.msra.mxu0 %v197
  %263 = vmatprep.subr.bf16.mxu0 %v200
  %264 = vmatpush1.bf16.msra.mxu0 %v199
  %265 = vmatprep.subr.bf16.mxu0 %v202
  %266 = vmatpush1.bf16.msra.mxu0 %v201
  %267 = vmatprep.subr.bf16.mxu0 %v204
  %268 = vmatpush1.bf16.msra.mxu0 %v203
  %269 = vmatprep.subr.bf16.mxu0 %v206
  %270 = vmatpush1.bf16.msra.mxu0 %v205
  %271 = vmatprep.subr.bf16.mxu0 %v208
  %272 = vmatpush1.bf16.msra.mxu0 %v207
  %273 = vmatprep.subr.bf16.mxu0 %v210
  %274 = vmatpush1.bf16.msra.mxu0 %v209
  %275 = vmatprep.subr.bf16.mxu0 %v212
  %276 = vmatpush1.bf16.msra.mxu0 %v211
  %277 = vmatprep.subr.bf16.mxu0 %v214
  %278 = vmatpush1.bf16.msra.mxu0 %v213
  %279 = vmatprep.subr.bf16.mxu0 %v216
  %280 = vmatpush1.bf16.msra.mxu0 %v215
  %281 = vmatprep.subr.bf16.mxu0 %v218
  %282 = vmatpush1.bf16.msra.mxu0 %v217
  %283 = vmatprep.mubr.bf16.mxu0 %v88
  %284 = vmatmul.mubr.bf16.gmra.mrb[0].mxu0 %v87
  %v285 = vpop.f32.mrb[0].mxu0
  %v286 = vadd.f32 %v74, %v285
  %v287 = vpop.f32.mrb[0].mxu0
  %v288 = vadd.f32 %v78, %v287
  %v289 = vpop.f32.mrb[0].mxu0
  %v290 = vadd.f32 %v74, %v289
  %v291 = vpop.f32.mrb[0].mxu0
  %v292 = vadd.f32 %v78, %v291
  %293 = vdwg.mxu0
  %v294 = vpack.c.bf16 %v290, %v286
  %v295 = vpack.c.bf16 %v292, %v288
  %v298 = vunpack.c.l.b16 %v294
  %v299 = vunpack.c.l.b16 %v295
  %v300 = vunpack.c.h.b16 %v294
  %v301 = vunpack.c.h.b16 %v295
  %v302 = vpack.c.b16 %v299, %v298
  %v303 = vpack.c.b16 %v301, %v300
  %306 = vst [vmem:[%s9] sm:$0xff] %v302
  %307 = vst [vmem:[%s9 + $0x8] sm:$0xff] %v303
  %v308 = vld [vmem:[%s1] sm:$0xff]
  %v309 = vld [vmem:[%s1 + $0x8] sm:$0xff]
  %v310 = vld [vmem:[%s5] sm:$0xff]
  %v311 = vld [vmem:[%s5 + $0x8] sm:$0xff]
  %v312 = vld [vmem:[%s5 + $0x10] sm:$0xff]
  %v313 = vld [vmem:[%s5 + $0x18] sm:$0xff]
  %v314 = vld [vmem:[%s5 + $0x20] sm:$0xff]
  %v315 = vld [vmem:[%s5 + $0x28] sm:$0xff]
  %v316 = vld [vmem:[%s5 + $0x30] sm:$0xff]
  %v317 = vld [vmem:[%s5 + $0x38] sm:$0xff]
  %v318 = vld [vmem:[%s5 + $0x40] sm:$0xff]
  %v319 = vld [vmem:[%s5 + $0x48] sm:$0xff]
  %v320 = vld [vmem:[%s5 + $0x50] sm:$0xff]
  %v321 = vld [vmem:[%s5 + $0x58] sm:$0xff]
  %v322 = vld [vmem:[%s5 + $0x60] sm:$0xff]
  %v323 = vld [vmem:[%s5 + $0x68] sm:$0xff]
  %v324 = vld [vmem:[%s5 + $0x70] sm:$0xff]
  %v325 = vld [vmem:[%s5 + $0x78] sm:$0xff]
  %v326 = vld [vmem:[%s5 + $0x80] sm:$0xff]
  %v327 = vld [vmem:[%s5 + $0x88] sm:$0xff]
  %v328 = vld [vmem:[%s5 + $0x90] sm:$0xff]
  %v329 = vld [vmem:[%s5 + $0x98] sm:$0xff]
  %v330 = vld [vmem:[%s5 + $0xa0] sm:$0xff]
  %v331 = vld [vmem:[%s5 + $0xa8] sm:$0xff]
  %v332 = vld [vmem:[%s5 + $0xb0] sm:$0xff]
  %v333 = vld [vmem:[%s5 + $0xb8] sm:$0xff]
  %v334 = vld [vmem:[%s5 + $0xc0] sm:$0xff]
  %v335 = vld [vmem:[%s5 + $0xc8] sm:$0xff]
  %v336 = vld [vmem:[%s5 + $0xd0] sm:$0xff]
  %v337 = vld [vmem:[%s5 + $0xd8] sm:$0xff]
  %v338 = vld [vmem:[%s5 + $0xe0] sm:$0xff]
  %v339 = vld [vmem:[%s5 + $0xe8] sm:$0xff]
  %v340 = vld [vmem:[%s5 + $0xf0] sm:$0xff]
  %v341 = vld [vmem:[%s5 + $0xf8] sm:$0xff]
  %v342 = vld [vmem:[%s6] sm:$0x3]
  %v344 = vlaneseq
  %v345 = vshrl.u32 %v344, 7
  %v346 = vsub.s32 0, %v345
  %v347 = vrot.slane %v342, %v346
  %v348 = vlaneseq
  %v349 = vshrl.u32 %v348, 7
  %v350 = vsub.s32 1, %v349
  %v351 = vrot.slane %v342, %v350
  %v356 = vunpack.c.l.b16 %v308
  %v357 = vunpack.c.h.b16 %v308
  %v358 = vunpack.c.l.b16 %v309
  %v359 = vunpack.c.h.b16 %v309
  %v360 = vpack.c.b16 %v358, %v356
  %v361 = vpack.c.b16 %v359, %v357
  %v396 = vunpack.c.l.b16 %v310
  %v397 = vunpack.c.h.b16 %v310
  %v398 = vunpack.c.l.b16 %v311
  %v399 = vunpack.c.h.b16 %v311
  %v400 = vunpack.c.l.b16 %v312
  %v401 = vunpack.c.h.b16 %v312
  %v402 = vunpack.c.l.b16 %v313
  %v403 = vunpack.c.h.b16 %v313
  %v404 = vunpack.c.l.b16 %v314
  %v405 = vunpack.c.h.b16 %v314
  %v406 = vunpack.c.l.b16 %v315
  %v407 = vunpack.c.h.b16 %v315
  %v408 = vunpack.c.l.b16 %v316
  %v409 = vunpack.c.h.b16 %v316
  %v410 = vunpack.c.l.b16 %v317
  %v411 = vunpack.c.h.b16 %v317
  %v412 = vunpack.c.l.b16 %v318
  %v413 = vunpack.c.h.b16 %v318
  %v414 = vunpack.c.l.b16 %v319
  %v415 = vunpack.c.h.b16 %v319
  %v416 = vunpack.c.l.b16 %v320
  %v417 = vunpack.c.h.b16 %v320
  %v418 = vunpack.c.l.b16 %v321
  %v419 = vunpack.c.h.b16 %v321
  %v420 = vunpack.c.l.b16 %v322
  %v421 = vunpack.c.h.b16 %v322
  %v422 = vunpack.c.l.b16 %v323
  %v423 = vunpack.c.h.b16 %v323
  %v424 = vunpack.c.l.b16 %v324
  %v425 = vunpack.c.h.b16 %v324
  %v426 = vunpack.c.l.b16 %v325
  %v427 = vunpack.c.h.b16 %v325
  %v428 = vunpack.c.l.b16 %v326
  %v429 = vunpack.c.h.b16 %v326
  %v430 = vunpack.c.l.b16 %v327
  %v431 = vunpack.c.h.b16 %v327
  %v432 = vunpack.c.l.b16 %v328
  %v433 = vunpack.c.h.b16 %v328
  %v434 = vunpack.c.l.b16 %v329
  %v435 = vunpack.c.h.b16 %v329
  %v436 = vunpack.c.l.b16 %v330
  %v437 = vunpack.c.h.b16 %v330
  %v438 = vunpack.c.l.b16 %v331
  %v439 = vunpack.c.h.b16 %v331
  %v440 = vunpack.c.l.b16 %v332
  %v441 = vunpack.c.h.b16 %v332
  %v442 = vunpack.c.l.b16 %v333
  %v443 = vunpack.c.h.b16 %v333
  %v444 = vunpack.c.l.b16 %v334
  %v445 = vunpack.c.h.b16 %v334
  %v446 = vunpack.c.l.b16 %v335
  %v447 = vunpack.c.h.b16 %v335
  %v448 = vunpack.c.l.b16 %v336
  %v449 = vunpack.c.h.b16 %v336
  %v450 = vunpack.c.l.b16 %v337
  %v451 = vunpack.c.h.b16 %v337
  %v452 = vunpack.c.l.b16 %v338
  %v453 = vunpack.c.h.b16 %v338
  %v454 = vunpack.c.l.b16 %v339
  %v455 = vunpack.c.h.b16 %v339
  %v456 = vunpack.c.l.b16 %v340
  %v457 = vunpack.c.h.b16 %v340
  %v458 = vunpack.c.l.b16 %v341
  %v459 = vunpack.c.h.b16 %v341
  %v460 = vpack.c.b16 %v398, %v396
  %v461 = vpack.c.b16 %v399, %v397
  %v462 = vpack.c.b16 %v402, %v400
  %v463 = vpack.c.b16 %v403, %v401
  %v464 = vpack.c.b16 %v406, %v404
  %v465 = vpack.c.b16 %v407, %v405
  %v466 = vpack.c.b16 %v410, %v408
  %v467 = vpack.c.b16 %v411, %v409
  %v468 = vpack.c.b16 %v414, %v412
  %v469 = vpack.c.b16 %v415, %v413
  %v470 = vpack.c.b16 %v418, %v416
  %v471 = vpack.c.b16 %v419, %v417
  %v472 = vpack.c.b16 %v422, %v420
  %v473 = vpack.c.b16 %v423, %v421
  %v474 = vpack.c.b16 %v426, %v424
  %v475 = vpack.c.b16 %v427, %v425
  %v476 = vpack.c.b16 %v430, %v428
  %v477 = vpack.c.b16 %v431, %v429
  %v478 = vpack.c.b16 %v434, %v432
  %v479 = vpack.c.b16 %v435, %v433
  %v480 = vpack.c.b16 %v438, %v436
  %v481 = vpack.c.b16 %v439, %v437
  %v482 = vpack.c.b16 %v442, %v440
  %v483 = vpack.c.b16 %v443, %v441
  %v484 = vpack.c.b16 %v446, %v444
  %v485 = vpack.c.b16 %v447, %v445
  %v486 = vpack.c.b16 %v450, %v448
  %v487 = vpack.c.b16 %v451, %v449
  %v488 = vpack.c.b16 %v454, %v452
  %v489 = vpack.c.b16 %v455, %v453
  %v490 = vpack.c.b16 %v458, %v456
  %v491 = vpack.c.b16 %v459, %v457
  %524 = vmatprep.subr.bf16.mxu0 %v461
  %525 = vmatpush1.bf16.msra.mxu0 %v460
  %526 = vmatprep.subr.bf16.mxu0 %v463
  %527 = vmatpush1.bf16.msra.mxu0 %v462
  %528 = vmatprep.subr.bf16.mxu0 %v465
  %529 = vmatpush1.bf16.msra.mxu0 %v464
  %530 = vmatprep.subr.bf16.mxu0 %v467
  %531 = vmatpush1.bf16.msra.mxu0 %v466
  %532 = vmatprep.subr.bf16.mxu0 %v469
  %533 = vmatpush1.bf16.msra.mxu0 %v468
  %534 = vmatprep.subr.bf16.mxu0 %v471
  %535 = vmatpush1.bf16.msra.mxu0 %v470
  %536 = vmatprep.subr.bf16.mxu0 %v473
  %537 = vmatpush1.bf16.msra.mxu0 %v472
  %538 = vmatprep.subr.bf16.mxu0 %v475
  %539 = vmatpush1.bf16.msra.mxu0 %v474
  %540 = vmatprep.subr.bf16.mxu0 %v477
  %541 = vmatpush1.bf16.msra.mxu0 %v476
  %542 = vmatprep.subr.bf16.mxu0 %v479
  %543 = vmatpush1.bf16.msra.mxu0 %v478
  %544 = vmatprep.subr.bf16.mxu0 %v481
  %545 = vmatpush1.bf16.msra.mxu0 %v480
  %546 = vmatprep.subr.bf16.mxu0 %v483
  %547 = vmatpush1.bf16.msra.mxu0 %v482
  %548 = vmatprep.subr.bf16.mxu0 %v485
  %549 = vmatpush1.bf16.msra.mxu0 %v484
  %550 = vmatprep.subr.bf16.mxu0 %v487
  %551 = vmatpush1.bf16.msra.mxu0 %v486
  %552 = vmatprep.subr.bf16.mxu0 %v489
  %553 = vmatpush1.bf16.msra.mxu0 %v488
  %554 = vmatprep.subr.bf16.mxu0 %v491
  %555 = vmatpush1.bf16.msra.mxu0 %v490
  %556 = vmatprep.mubr.bf16.mxu0 %v361
  %557 = vmatmul.mubr.bf16.gmra.mrb[0].mxu0 %v360
  %v558 = vpop.f32.mrb[0].mxu0
  %v559 = vadd.f32 %v347, %v558
  %v560 = vpop.f32.mrb[0].mxu0
  %v561 = vadd.f32 %v351, %v560
  %v562 = vpop.f32.mrb[0].mxu0
  %v563 = vadd.f32 %v347, %v562
  %v564 = vpop.f32.mrb[0].mxu0
  %v565 = vadd.f32 %v351, %v564
  %566 = vdwg.mxu0
  %v567 = vpack.c.bf16 %v563, %v559
  %v568 = vpack.c.bf16 %v565, %v561
  %v571 = vunpack.c.l.b16 %v567
  %v572 = vunpack.c.l.b16 %v568
  %v573 = vunpack.c.h.b16 %v567
  %v574 = vunpack.c.h.b16 %v568
  %v575 = vpack.c.b16 %v572, %v571
  %v576 = vpack.c.b16 %v574, %v573
  %579 = vst [vmem:[%s10] sm:$0xff] %v575
  %580 = vst [vmem:[%s10 + $0x8] sm:$0xff] %v576
  %v581 = vld [vmem:[%s2] sm:$0xff]
  %v582 = vld [vmem:[%s2 + $0x8] sm:$0xff]
  %v583 = vld [vmem:[%s7] sm:$0xff]
  %v584 = vld [vmem:[%s7 + $0x8] sm:$0xff]
  %v585 = vld [vmem:[%s7 + $0x10] sm:$0xff]
  %v586 = vld [vmem:[%s7 + $0x18] sm:$0xff]
  %v587 = vld [vmem:[%s7 + $0x20] sm:$0xff]
  %v588 = vld [vmem:[%s7 + $0x28] sm:$0xff]
  %v589 = vld [vmem:[%s7 + $0x30] sm:$0xff]
  %v590 = vld [vmem:[%s7 + $0x38] sm:$0xff]
  %v591 = vld [vmem:[%s7 + $0x40] sm:$0xff]
  %v592 = vld [vmem:[%s7 + $0x48] sm:$0xff]
  %v593 = vld [vmem:[%s7 + $0x50] sm:$0xff]
  %v594 = vld [vmem:[%s7 + $0x58] sm:$0xff]
  %v595 = vld [vmem:[%s7 + $0x60] sm:$0xff]
  %v596 = vld [vmem:[%s7 + $0x68] sm:$0xff]
  %v597 = vld [vmem:[%s7 + $0x70] sm:$0xff]
  %v598 = vld [vmem:[%s7 + $0x78] sm:$0xff]
  %v599 = vld [vmem:[%s7 + $0x80] sm:$0xff]
  %v600 = vld [vmem:[%s7 + $0x88] sm:$0xff]
  %v601 = vld [vmem:[%s7 + $0x90] sm:$0xff]
  %v602 = vld [vmem:[%s7 + $0x98] sm:$0xff]
  %v603 = vld [vmem:[%s7 + $0xa0] sm:$0xff]
  %v604 = vld [vmem:[%s7 + $0xa8] sm:$0xff]
  %v605 = vld [vmem:[%s7 + $0xb0] sm:$0xff]
  %v606 = vld [vmem:[%s7 + $0xb8] sm:$0xff]
  %v607 = vld [vmem:[%s7 + $0xc0] sm:$0xff]
  %v608 = vld [vmem:[%s7 + $0xc8] sm:$0xff]
  %v609 = vld [vmem:[%s7 + $0xd0] sm:$0xff]
  %v610 = vld [vmem:[%s7 + $0xd8] sm:$0xff]
  %v611 = vld [vmem:[%s7 + $0xe0] sm:$0xff]
  %v612 = vld [vmem:[%s7 + $0xe8] sm:$0xff]
  %v613 = vld [vmem:[%s7 + $0xf0] sm:$0xff]
  %v614 = vld [vmem:[%s7 + $0xf8] sm:$0xff]
  %v615 = vld [vmem:[%s8] sm:$0x3]
  %v617 = vlaneseq
  %v618 = vshrl.u32 %v617, 7
  %v619 = vsub.s32 0, %v618
  %v620 = vrot.slane %v615, %v619
  %v621 = vlaneseq
  %v622 = vshrl.u32 %v621, 7
  %v623 = vsub.s32 1, %v622
  %v624 = vrot.slane %v615, %v623
  %v629 = vunpack.c.l.b16 %v581
  %v630 = vunpack.c.h.b16 %v581
  %v631 = vunpack.c.l.b16 %v582
  %v632 = vunpack.c.h.b16 %v582
  %v633 = vpack.c.b16 %v631, %v629
  %v634 = vpack.c.b16 %v632, %v630
  %v669 = vunpack.c.l.b16 %v583
  %v670 = vunpack.c.h.b16 %v583
  %v671 = vunpack.c.l.b16 %v584
  %v672 = vunpack.c.h.b16 %v584
  %v673 = vunpack.c.l.b16 %v585
  %v674 = vunpack.c.h.b16 %v585
  %v675 = vunpack.c.l.b16 %v586
  %v676 = vunpack.c.h.b16 %v586
  %v677 = vunpack.c.l.b16 %v587
  %v678 = vunpack.c.h.b16 %v587
  %v679 = vunpack.c.l.b16 %v588
  %v680 = vunpack.c.h.b16 %v588
  %v681 = vunpack.c.l.b16 %v589
  %v682 = vunpack.c.h.b16 %v589
  %v683 = vunpack.c.l.b16 %v590
  %v684 = vunpack.c.h.b16 %v590
  %v685 = vunpack.c.l.b16 %v591
  %v686 = vunpack.c.h.b16 %v591
  %v687 = vunpack.c.l.b16 %v592
  %v688 = vunpack.c.h.b16 %v592
  %v689 = vunpack.c.l.b16 %v593
  %v690 = vunpack.c.h.b16 %v593
  %v691 = vunpack.c.l.b16 %v594
  %v692 = vunpack.c.h.b16 %v594
  %v693 = vunpack.c.l.b16 %v595
  %v694 = vunpack.c.h.b16 %v595
  %v695 = vunpack.c.l.b16 %v596
  %v696 = vunpack.c.h.b16 %v596
  %v697 = vunpack.c.l.b16 %v597
  %v698 = vunpack.c.h.b16 %v597
  %v699 = vunpack.c.l.b16 %v598
  %v700 = vunpack.c.h.b16 %v598
  %v701 = vunpack.c.l.b16 %v599
  %v702 = vunpack.c.h.b16 %v599
  %v703 = vunpack.c.l.b16 %v600
  %v704 = vunpack.c.h.b16 %v600
  %v705 = vunpack.c.l.b16 %v601
  %v706 = vunpack.c.h.b16 %v601
  %v707 = vunpack.c.l.b16 %v602
  %v708 = vunpack.c.h.b16 %v602
  %v709 = vunpack.c.l.b16 %v603
  %v710 = vunpack.c.h.b16 %v603
  %v711 = vunpack.c.l.b16 %v604
  %v712 = vunpack.c.h.b16 %v604
  %v713 = vunpack.c.l.b16 %v605
  %v714 = vunpack.c.h.b16 %v605
  %v715 = vunpack.c.l.b16 %v606
  %v716 = vunpack.c.h.b16 %v606
  %v717 = vunpack.c.l.b16 %v607
  %v718 = vunpack.c.h.b16 %v607
  %v719 = vunpack.c.l.b16 %v608
  %v720 = vunpack.c.h.b16 %v608
  %v721 = vunpack.c.l.b16 %v609
  %v722 = vunpack.c.h.b16 %v609
  %v723 = vunpack.c.l.b16 %v610
  %v724 = vunpack.c.h.b16 %v610
  %v725 = vunpack.c.l.b16 %v611
  %v726 = vunpack.c.h.b16 %v611
  %v727 = vunpack.c.l.b16 %v612
  %v728 = vunpack.c.h.b16 %v612
  %v729 = vunpack.c.l.b16 %v613
  %v730 = vunpack.c.h.b16 %v613
  %v731 = vunpack.c.l.b16 %v614
  %v732 = vunpack.c.h.b16 %v614
  %v733 = vpack.c.b16 %v671, %v669
  %v734 = vpack.c.b16 %v672, %v670
  %v735 = vpack.c.b16 %v675, %v673
  %v736 = vpack.c.b16 %v676, %v674
  %v737 = vpack.c.b16 %v679, %v677
  %v738 = vpack.c.b16 %v680, %v678
  %v739 = vpack.c.b16 %v683, %v681
  %v740 = vpack.c.b16 %v684, %v682
  %v741 = vpack.c.b16 %v687, %v685
  %v742 = vpack.c.b16 %v688, %v686
  %v743 = vpack.c.b16 %v691, %v689
  %v744 = vpack.c.b16 %v692, %v690
  %v745 = vpack.c.b16 %v695, %v693
  %v746 = vpack.c.b16 %v696, %v694
  %v747 = vpack.c.b16 %v699, %v697
  %v748 = vpack.c.b16 %v700, %v698
  %v749 = vpack.c.b16 %v703, %v701
  %v750 = vpack.c.b16 %v704, %v702
  %v751 = vpack.c.b16 %v707, %v705
  %v752 = vpack.c.b16 %v708, %v706
  %v753 = vpack.c.b16 %v711, %v709
  %v754 = vpack.c.b16 %v712, %v710
  %v755 = vpack.c.b16 %v715, %v713
  %v756 = vpack.c.b16 %v716, %v714
  %v757 = vpack.c.b16 %v719, %v717
  %v758 = vpack.c.b16 %v720, %v718
  %v759 = vpack.c.b16 %v723, %v721
  %v760 = vpack.c.b16 %v724, %v722
  %v761 = vpack.c.b16 %v727, %v725
  %v762 = vpack.c.b16 %v728, %v726
  %v763 = vpack.c.b16 %v731, %v729
  %v764 = vpack.c.b16 %v732, %v730
  %797 = vmatprep.subr.bf16.mxu0 %v734
  %798 = vmatpush1.bf16.msra.mxu0 %v733
  %799 = vmatprep.subr.bf16.mxu0 %v736
  %800 = vmatpush1.bf16.msra.mxu0 %v735
  %801 = vmatprep.subr.bf16.mxu0 %v738
  %802 = vmatpush1.bf16.msra.mxu0 %v737
  %803 = vmatprep.subr.bf16.mxu0 %v740
  %804 = vmatpush1.bf16.msra.mxu0 %v739
  %805 = vmatprep.subr.bf16.mxu0 %v742
  %806 = vmatpush1.bf16.msra.mxu0 %v741
  %807 = vmatprep.subr.bf16.mxu0 %v744
  %808 = vmatpush1.bf16.msra.mxu0 %v743
  %809 = vmatprep.subr.bf16.mxu0 %v746
  %810 = vmatpush1.bf16.msra.mxu0 %v745
  %811 = vmatprep.subr.bf16.mxu0 %v748
  %812 = vmatpush1.bf16.msra.mxu0 %v747
  %813 = vmatprep.subr.bf16.mxu0 %v750
  %814 = vmatpush1.bf16.msra.mxu0 %v749
  %815 = vmatprep.subr.bf16.mxu0 %v752
  %816 = vmatpush1.bf16.msra.mxu0 %v751
  %817 = vmatprep.subr.bf16.mxu0 %v754
  %818 = vmatpush1.bf16.msra.mxu0 %v753
  %819 = vmatprep.subr.bf16.mxu0 %v756
  %820 = vmatpush1.bf16.msra.mxu0 %v755
  %821 = vmatprep.subr.bf16.mxu0 %v758
  %822 = vmatpush1.bf16.msra.mxu0 %v757
  %823 = vmatprep.subr.bf16.mxu0 %v760
  %824 = vmatpush1.bf16.msra.mxu0 %v759
  %825 = vmatprep.subr.bf16.mxu0 %v762
  %826 = vmatpush1.bf16.msra.mxu0 %v761
  %827 = vmatprep.subr.bf16.mxu0 %v764
  %828 = vmatpush1.bf16.msra.mxu0 %v763
  %829 = vmatprep.mubr.bf16.mxu0 %v634
  %830 = vmatmul.mubr.bf16.gmra.mrb[0].mxu0 %v633
  %v831 = vpop.f32.mrb[0].mxu0
  %v832 = vadd.f32 %v620, %v831
  %v833 = vpop.f32.mrb[0].mxu0
  %v834 = vadd.f32 %v624, %v833
  %v835 = vpop.f32.mrb[0].mxu0
  %v836 = vadd.f32 %v620, %v835
  %v837 = vpop.f32.mrb[0].mxu0
  %v838 = vadd.f32 %v624, %v837
  %839 = vdwg.mxu0
  %v840 = vpack.c.bf16 %v836, %v832
  %v841 = vpack.c.bf16 %v838, %v834
  %v844 = vunpack.c.l.b16 %v840
  %v845 = vunpack.c.l.b16 %v841
  %v846 = vunpack.c.h.b16 %v840
  %v847 = vunpack.c.h.b16 %v841
  %v848 = vpack.c.b16 %v845, %v844
  %v849 = vpack.c.b16 %v847, %v846
  %852 = vst [vmem:[%s11] sm:$0xff] %v848
  %853 = vst [vmem:[%s11 + $0x8] sm:$0xff] %v849
  // Predicated region
  $region38: #{multi_head_attention.3} parent=0 // pred_check
    _
  $region39: #{multi_head_attention.3} parent=0 // pred_check_branch
    %855 = sbr.rel (0) target = $region41
  $region40: #{multi_head_attention.3} parent=0 // pred_region
    _
  $region41: #{multi_head_attention.3} parent=0 // pred_fallthru
    _
  // Predicated region
  $region42: #{multi_head_attention.3} parent=0 // pred_check
    _
  $region43: #{multi_head_attention.3} parent=0 // pred_check_branch
    %857 = sbr.rel (0) target = $region45
  $region44: #{multi_head_attention.3} parent=0 // pred_region
    _
  $region45: #{multi_head_attention.3} parent=0 // pred_fallthru
    _
  // Predicated region
  $region46: #{multi_head_attention.3} parent=0 // pred_check
    _
  $region47: #{multi_head_attention.3} parent=0 // pred_check_branch
    %859 = sbr.rel (0) target = $region49
  $region48: #{multi_head_attention.3} parent=0 // pred_region
    _
  $region49: #{multi_head_attention.3} parent=0 // pred_fallthru
    _
  // Predicated region
  $region50: #{multi_head_attention.3} parent=0 // pred_check
    _
  $region51: #{multi_head_attention.3} parent=0 // pred_check_branch
    %861 = sbr.rel (0) target = $region53
  $region52: #{multi_head_attention.3} parent=0 // pred_region
    _
  $region53: #{multi_head_attention.3} parent=0 // pred_fallthru
    _
  // Predicated region
  $region54: #{multi_head_attention.3} parent=0 // pred_check
    _
  $region55: #{multi_head_attention.3} parent=0 // pred_check_branch
    %863 = sbr.rel (0) target = $region57
  $region56: #{multi_head_attention.3} parent=0 // pred_region
    _
  $region57: #{multi_head_attention.3} parent=0 // pred_fallthru
    _
  // Predicated region
  $region58: #{multi_head_attention.3} parent=0 // pred_check
    _
  $region59: #{multi_head_attention.3} parent=0 // pred_check_branch
    %865 = sbr.rel (0) target = $region61
  $region60: #{multi_head_attention.3} parent=0 // pred_region
    _
  $region61: #{multi_head_attention.3} parent=0 // pred_fallthru
    _

</llo_original>
